<compile_context>
chip_gen: v7x
topology: tpu7x:2x2x1
jax: 0.10.0
libtpu: 0.0.40
codegen_flags: <defaults>
</compile_context>

<pallas_src>
import jax
import jax.numpy as jnp
from jax.experimental import pallas as pl
from jax.experimental.pallas import tpu as pltpu

KSIZE = 7
PAD = 3  # "same" padding for kernel_size=7


def _default_batch_block(N, W):
    """Largest divisor NB of N with lane width 2*NB*W <= 512 that still leaves
    >= 2 grid steps (v7x has two TensorCores) whenever the batch allows it."""
    best = 1
    for nb in range(1, N + 1):
        if N % nb:
            continue
        if 2 * nb * W > 512:
            continue
        if N >= 2 and N // nb < 2:
            continue
        best = nb
    return best


def spatial_attention(x, weight, *, batch_block=None):
    """x: (N, C, H, W); weight: (1, 2, 7, 7) OIHW, bias-free. -> (N, 1, H, W) f32."""
    N, C, H, W = x.shape
    NB = _default_batch_block(N, W) if batch_block is None else batch_block
    assert N % NB == 0, "batch_block must divide the batch size"
    G = N // NB
    NBW = NB * W
    L = 2 * NBW          # lane axis: [avg segment | max segment], each NB*W wide

    # Pack NB batch elements side by side along lanes: (G, C, H, NB*W).
    xp = x.reshape(G, NB, C, H, W).transpose(0, 2, 3, 1, 4).reshape(G, C, H, NBW)

    # Lane-broadcast weight table: w_lane[t, 0, c*NBW + b*W + w] = weight[0, c, t//7, t%7].
    wt = weight.astype(jnp.float32).reshape(2, KSIZE * KSIZE).T          # (49, 2)
    w_lane = jnp.broadcast_to(wt[:, :, None], (KSIZE * KSIZE, 2, NBW))
    w_lane = w_lane.reshape(KSIZE * KSIZE, 1, L)

    def kernel(w_ref, x_ref, o_ref, shifts_ref):
        # w_ref     : VMEM (49, 1, L)        lane-broadcast conv weights
        # x_ref     : VMEM (1, C, H, NB*W)   packed input block
        # o_ref     : VMEM (1, H, NB*W)      packed sigmoid(conv) output
        # shifts_ref: VMEM (7, H+2*PAD, L)   W-shifted, H-zero-padded planes
        xb = x_ref[0].astype(jnp.float32)              # (C, H, NB*W)
        avg = jnp.mean(xb, axis=0)                     # channel mean -> (H, NB*W)
        mx = jnp.max(xb, axis=0)                       # channel max  -> (H, NB*W)

        # (avg | max) packed along lanes with PAD zero columns at both ends.
        zc = jnp.zeros((H, PAD), jnp.float32)
        packed = jnp.concatenate([zc, avg, mx, zc], axis=1)   # (H, L + 2*PAD)

        # Per-lane column index inside its W-wide image segment.
        lane_w = jax.lax.broadcasted_iota(jnp.int32, (1, L), 1) % W

        # Build the 7 W-shifted planes once (shared by both channels and all ky);
        # zero border rows provide the H padding so ky becomes a sublane offset.
        zr = jnp.zeros((PAD, L), jnp.float32)
        for kx in range(KSIZE):
            col = lane_w + (kx - PAD)
            valid = jnp.logical_and(col >= 0, col < W)
            shifted = jnp.where(valid, packed[:, kx:kx + L], 0.0)   # (H, L)
            shifts_ref[kx, :PAD, :] = zr
            shifts_ref[kx, PAD:PAD + H, :] = shifted
            shifts_ref[kx, PAD + H:, :] = zr

        # 49 taps, channels fused in lanes, 4 independent accumulator chains.
        accs = [jnp.zeros((H, L), jnp.float32) for _ in range(4)]
        t = 0
        for ky in range(KSIZE):
            for kx in range(KSIZE):
                tile = shifts_ref[kx, ky:ky + H, :]    # cheap sublane-offset vld
                accs[t % 4] = accs[t % 4] + w_ref[t] * tile
                t += 1
        acc = (accs[0] + accs[1]) + (accs[2] + accs[3])

        # Fold the avg/max lane halves (channel sum) and apply the sigmoid.
        conv = acc[:, :NBW] + acc[:, NBW:]
        o_ref[0] = jax.nn.sigmoid(conv)

    out_packed = pl.pallas_call(
        kernel,
        out_shape=jax.ShapeDtypeStruct((G, H, NBW), jnp.float32),
        grid=(G,),
        in_specs=[
            pl.BlockSpec((KSIZE * KSIZE, 1, L), lambda g: (0, 0, 0)),   # weights
            pl.BlockSpec((1, C, H, NBW), lambda g: (g, 0, 0, 0)),       # packed x
        ],
        out_specs=pl.BlockSpec((1, H, NBW), lambda g: (g, 0, 0)),
        scratch_shapes=[pltpu.VMEM((KSIZE, H + 2 * PAD, L), jnp.float32)],
        compiler_params=pltpu.CompilerParams(dimension_semantics=("parallel",)),
    )(w_lane, xp)

    # Un-pack the lane-dense output slab back to NCHW: (N, 1, H, W).
    return out_packed.reshape(G, H, NB, W).transpose(0, 2, 1, 3).reshape(N, 1, H, W)


def reference(x, weight):
    avg = jnp.mean(x, axis=1, keepdims=True)
    mx = jnp.max(x, axis=1, keepdims=True)
    cat = jnp.concatenate([avg, mx], axis=1)
    out = jax.lax.conv_general_dilated(
        cat, weight, window_strides=(1, 1),
        padding=((PAD, PAD), (PAD, PAD)),
        dimension_numbers=("NCHW", "OIHW", "NCHW"))
    return jax.nn.sigmoid(out)


if __name__ == "__main__":
    key = jax.random.PRNGKey(0)
    kx_key, kw_key = jax.random.split(key)

    # Small shapes consistent with the module: batch=2, channels=4, spatial=16.
    x = jax.random.normal(kx_key, (2, 4, 16, 16), dtype=jnp.float32)

    # Deterministic Kaiming-uniform-like init for the 2->1 conv (bias=False).
    fan_in = 2 * KSIZE * KSIZE
    bound = (1.0 / fan_in) ** 0.5
    weight = jax.random.uniform(kw_key, (1, 2, KSIZE, KSIZE), dtype=jnp.float32,
                                minval=-bound, maxval=bound)

    out = jax.block_until_ready(spatial_attention(x, weight))
    ref = jax.block_until_ready(reference(x, weight))
    assert out.shape == (2, 1, 16, 16)
    assert jnp.allclose(out, ref, atol=1e-5, rtol=1e-5)
    print("KERNEL_OK")
</pallas_src>

<mosaic_0001>
module attributes {stable_mosaic.version = 11 : i64} {
  func.func @kernel(%arg0: i32, %arg1: memref<49x1x32xf32, #tpu.memory_space<vmem>>, %arg2: memref<1x4x16x16xf32, #tpu.memory_space<vmem>>, %arg3: memref<1x16x16xf32, #tpu.memory_space<vmem>>, %arg4: memref<7x22x32xf32, #tpu.memory_space<vmem>>) attributes {dimension_semantics = [#tpu.dimension_semantics<parallel>], iteration_bounds = array<i64: 2>, scalar_prefetch = 0 : i64, scratch_operands = 1 : i64, tpu.core_type = #tpu.core_type<tc>, window_params = [{pipeline_mode = #tpu.pipeline_mode<synchronous>, transform_indices = @transform_0, window_bounds = array<i64: 49, 1, 32>}, {transform_indices = @transform_1, window_bounds = array<i64: 1, 4, 16, 16>}, {transform_indices = @transform_2, window_bounds = array<i64: 1, 16, 16>}]} {
    %c0 = arith.constant 0 : index
    %c0_0 = arith.constant 0 : index
    %c0_1 = arith.constant 0 : index
    %c0_2 = arith.constant 0 : index
    %0 = vector.load %arg2[%c0, %c0_0, %c0_1, %c0_2] : memref<1x4x16x16xf32, #tpu.memory_space<vmem>>, vector<1x4x16x16xf32>
    %1 = vector.shape_cast %0 : vector<1x4x16x16xf32> to vector<4x16x16xf32>
    %cst = arith.constant dense<0.000000e+00> : vector<16x16xf32>
    %2 = vector.multi_reduction <add>, %1, %cst [0] : vector<4x16x16xf32> to vector<16x16xf32>
    %cst_3 = arith.constant 4.000000e+00 : f32
    %3 = vector.broadcast %cst_3 : f32 to vector<16x16xf32>
    %4 = arith.divf %2, %3 : vector<16x16xf32>
    %cst_4 = arith.constant dense<0xFF800000> : vector<16x16xf32>
    %5 = vector.multi_reduction <maximumf>, %1, %cst_4 [0] : vector<4x16x16xf32> to vector<16x16xf32>
    %cst_5 = arith.constant 0.000000e+00 : f32
    %6 = vector.broadcast %cst_5 : f32 to vector<16x3xf32>
    %7 = tpu.concatenate %6, %4, %5, %6 in 1 : vector<16x3xf32>, vector<16x16xf32>, vector<16x16xf32>, vector<16x3xf32> -> vector<16x38xf32>
    %8 = tpu.iota {dimensions = array<i32: 1>} : vector<1x32xi32>
    %c16_i32 = arith.constant 16 : i32
    %c0_i32 = arith.constant 0 : i32
    %9 = arith.cmpi eq, %c16_i32, %c0_i32 : i32
    %c1_i32 = arith.constant 1 : i32
    %10 = arith.select %9, %c1_i32, %c16_i32 : i32
    %11 = vector.broadcast %10 : i32 to vector<1x32xi32>
    %12 = arith.remsi %8, %11 : vector<1x32xi32>
    %c0_i32_6 = arith.constant 0 : i32
    %13 = vector.broadcast %c0_i32_6 : i32 to vector<1x32xi32>
    %14 = arith.cmpi ne, %12, %13 : vector<1x32xi32>
    %c0_i32_7 = arith.constant 0 : i32
    %15 = vector.broadcast %c0_i32_7 : i32 to vector<1x32xi32>
    %16 = arith.cmpi slt, %12, %15 : vector<1x32xi32>
    %c0_i32_8 = arith.constant 0 : i32
    %17 = arith.cmpi slt, %10, %c0_i32_8 : i32
    %18 = vector.broadcast %17 : i1 to vector<1x32xi1>
    %19 = vector.broadcast %18 : vector<1x32xi1> to vector<1x32xi1>
    %20 = arith.xori %16, %19 : vector<1x32xi1>
    %21 = arith.andi %20, %14 : vector<1x32xi1>
    %22 = vector.broadcast %10 : i32 to vector<1x32xi32>
    %23 = arith.addi %12, %22 : vector<1x32xi32>
    %24 = arith.select %21, %23, %12 : vector<1x32xi1>, vector<1x32xi32>
    %cst_9 = arith.constant 0.000000e+00 : f32
    %25 = vector.broadcast %cst_9 : f32 to vector<3x32xf32>
    %c-3_i32 = arith.constant -3 : i32
    %26 = vector.broadcast %c-3_i32 : i32 to vector<1x32xi32>
    %27 = arith.addi %24, %26 : vector<1x32xi32>
    %c0_i32_10 = arith.constant 0 : i32
    %28 = vector.broadcast %c0_i32_10 : i32 to vector<1x32xi32>
    %29 = arith.cmpi sge, %27, %28 : vector<1x32xi32>
    %c16_i32_11 = arith.constant 16 : i32
    %30 = vector.broadcast %c16_i32_11 : i32 to vector<1x32xi32>
    %31 = arith.cmpi slt, %27, %30 : vector<1x32xi32>
    %32 = arith.andi %29, %31 : vector<1x32xi1>
    %33 = vector.extract_strided_slice %7 {offsets = [0, 0], sizes = [16, 32], strides = [1, 1]} : vector<16x38xf32> to vector<16x32xf32>
    %cst_12 = arith.constant 0.000000e+00 : f32
    %34 = vector.shape_cast %32 : vector<1x32xi1> to vector<1x32xi1>
    %35 = vector.broadcast %34 : vector<1x32xi1> to vector<16x32xi1>
    %36 = vector.broadcast %cst_12 : f32 to vector<16x32xf32>
    %37 = arith.select %35, %33, %36 : vector<16x32xi1>, vector<16x32xf32>
    %c0_13 = arith.constant 0 : index
    %c0_14 = arith.constant 0 : index
    %c0_15 = arith.constant 0 : index
    %38 = vector.load %arg4[%c0_13, %c0_14, %c0_15] : memref<7x22x32xf32, #tpu.memory_space<vmem>>, vector<1x3x32xf32>
    %39 = vector.shape_cast %38 : vector<1x3x32xf32> to vector<3x32xf32>
    %40 = vector.shape_cast %25 : vector<3x32xf32> to vector<1x3x32xf32>
    tpu.vector_store %arg4[%c0_13, %c0_14, %c0_15], %40 {strides = array<i32>} : memref<7x22x32xf32, #tpu.memory_space<vmem>>, vector<1x3x32xf32>,
    %c0_16 = arith.constant 0 : index
    %c3 = arith.constant 3 : index
    %c0_17 = arith.constant 0 : index
    %41 = vector.load %arg4[%c0_16, %c3, %c0_17] : memref<7x22x32xf32, #tpu.memory_space<vmem>>, vector<1x16x32xf32>
    %42 = vector.shape_cast %41 : vector<1x16x32xf32> to vector<16x32xf32>
    %43 = vector.shape_cast %37 : vector<16x32xf32> to vector<1x16x32xf32>
    tpu.vector_store %arg4[%c0_16, %c3, %c0_17], %43 {strides = array<i32>} : memref<7x22x32xf32, #tpu.memory_space<vmem>>, vector<1x16x32xf32>,
    %c0_18 = arith.constant 0 : index
    %c19 = arith.constant 19 : index
    %c0_19 = arith.constant 0 : index
    %44 = vector.load %arg4[%c0_18, %c19, %c0_19] : memref<7x22x32xf32, #tpu.memory_space<vmem>>, vector<1x3x32xf32>
    %45 = vector.shape_cast %44 : vector<1x3x32xf32> to vector<3x32xf32>
    %46 = vector.shape_cast %25 : vector<3x32xf32> to vector<1x3x32xf32>
    tpu.vector_store %arg4[%c0_18, %c19, %c0_19], %46 {strides = array<i32>} : memref<7x22x32xf32, #tpu.memory_space<vmem>>, vector<1x3x32xf32>,
    %c-2_i32 = arith.constant -2 : i32
    %47 = vector.broadcast %c-2_i32 : i32 to vector<1x32xi32>
    %48 = arith.addi %24, %47 : vector<1x32xi32>
    %c0_i32_20 = arith.constant 0 : i32
    %49 = vector.broadcast %c0_i32_20 : i32 to vector<1x32xi32>
    %50 = arith.cmpi sge, %48, %49 : vector<1x32xi32>
    %c16_i32_21 = arith.constant 16 : i32
    %51 = vector.broadcast %c16_i32_21 : i32 to vector<1x32xi32>
    %52 = arith.cmpi slt, %48, %51 : vector<1x32xi32>
    %53 = arith.andi %50, %52 : vector<1x32xi1>
    %54 = vector.extract_strided_slice %7 {offsets = [0, 1], sizes = [16, 32], strides = [1, 1]} : vector<16x38xf32> to vector<16x32xf32>
    %cst_22 = arith.constant 0.000000e+00 : f32
    %55 = vector.shape_cast %53 : vector<1x32xi1> to vector<1x32xi1>
    %56 = vector.broadcast %55 : vector<1x32xi1> to vector<16x32xi1>
    %57 = vector.broadcast %cst_22 : f32 to vector<16x32xf32>
    %58 = arith.select %56, %54, %57 : vector<16x32xi1>, vector<16x32xf32>
    %c1 = arith.constant 1 : index
    %c0_23 = arith.constant 0 : index
    %c0_24 = arith.constant 0 : index
    %59 = vector.load %arg4[%c1, %c0_23, %c0_24] : memref<7x22x32xf32, #tpu.memory_space<vmem>>, vector<1x3x32xf32>
    %60 = vector.shape_cast %59 : vector<1x3x32xf32> to vector<3x32xf32>
    %61 = vector.shape_cast %25 : vector<3x32xf32> to vector<1x3x32xf32>
    tpu.vector_store %arg4[%c1, %c0_23, %c0_24], %61 {strides = array<i32>} : memref<7x22x32xf32, #tpu.memory_space<vmem>>, vector<1x3x32xf32>,
    %c1_25 = arith.constant 1 : index
    %c3_26 = arith.constant 3 : index
    %c0_27 = arith.constant 0 : index
    %62 = vector.load %arg4[%c1_25, %c3_26, %c0_27] : memref<7x22x32xf32, #tpu.memory_space<vmem>>, vector<1x16x32xf32>
    %63 = vector.shape_cast %62 : vector<1x16x32xf32> to vector<16x32xf32>
    %64 = vector.shape_cast %58 : vector<16x32xf32> to vector<1x16x32xf32>
    tpu.vector_store %arg4[%c1_25, %c3_26, %c0_27], %64 {strides = array<i32>} : memref<7x22x32xf32, #tpu.memory_space<vmem>>, vector<1x16x32xf32>,
    %c1_28 = arith.constant 1 : index
    %c19_29 = arith.constant 19 : index
    %c0_30 = arith.constant 0 : index
    %65 = vector.load %arg4[%c1_28, %c19_29, %c0_30] : memref<7x22x32xf32, #tpu.memory_space<vmem>>, vector<1x3x32xf32>
    %66 = vector.shape_cast %65 : vector<1x3x32xf32> to vector<3x32xf32>
    %67 = vector.shape_cast %25 : vector<3x32xf32> to vector<1x3x32xf32>
    tpu.vector_store %arg4[%c1_28, %c19_29, %c0_30], %67 {strides = array<i32>} : memref<7x22x32xf32, #tpu.memory_space<vmem>>, vector<1x3x32xf32>,
    %c-1_i32 = arith.constant -1 : i32
    %68 = vector.broadcast %c-1_i32 : i32 to vector<1x32xi32>
    %69 = arith.addi %24, %68 : vector<1x32xi32>
    %c0_i32_31 = arith.constant 0 : i32
    %70 = vector.broadcast %c0_i32_31 : i32 to vector<1x32xi32>
    %71 = arith.cmpi sge, %69, %70 : vector<1x32xi32>
    %c16_i32_32 = arith.constant 16 : i32
    %72 = vector.broadcast %c16_i32_32 : i32 to vector<1x32xi32>
    %73 = arith.cmpi slt, %69, %72 : vector<1x32xi32>
    %74 = arith.andi %71, %73 : vector<1x32xi1>
    %75 = vector.extract_strided_slice %7 {offsets = [0, 2], sizes = [16, 32], strides = [1, 1]} : vector<16x38xf32> to vector<16x32xf32>
    %cst_33 = arith.constant 0.000000e+00 : f32
    %76 = vector.shape_cast %74 : vector<1x32xi1> to vector<1x32xi1>
    %77 = vector.broadcast %76 : vector<1x32xi1> to vector<16x32xi1>
    %78 = vector.broadcast %cst_33 : f32 to vector<16x32xf32>
    %79 = arith.select %77, %75, %78 : vector<16x32xi1>, vector<16x32xf32>
    %c2 = arith.constant 2 : index
    %c0_34 = arith.constant 0 : index
    %c0_35 = arith.constant 0 : index
    %80 = vector.load %arg4[%c2, %c0_34, %c0_35] : memref<7x22x32xf32, #tpu.memory_space<vmem>>, vector<1x3x32xf32>
    %81 = vector.shape_cast %80 : vector<1x3x32xf32> to vector<3x32xf32>
    %82 = vector.shape_cast %25 : vector<3x32xf32> to vector<1x3x32xf32>
    tpu.vector_store %arg4[%c2, %c0_34, %c0_35], %82 {strides = array<i32>} : memref<7x22x32xf32, #tpu.memory_space<vmem>>, vector<1x3x32xf32>,
    %c2_36 = arith.constant 2 : index
    %c3_37 = arith.constant 3 : index
    %c0_38 = arith.constant 0 : index
    %83 = vector.load %arg4[%c2_36, %c3_37, %c0_38] : memref<7x22x32xf32, #tpu.memory_space<vmem>>, vector<1x16x32xf32>
    %84 = vector.shape_cast %83 : vector<1x16x32xf32> to vector<16x32xf32>
    %85 = vector.shape_cast %79 : vector<16x32xf32> to vector<1x16x32xf32>
    tpu.vector_store %arg4[%c2_36, %c3_37, %c0_38], %85 {strides = array<i32>} : memref<7x22x32xf32, #tpu.memory_space<vmem>>, vector<1x16x32xf32>,
    %c2_39 = arith.constant 2 : index
    %c19_40 = arith.constant 19 : index
    %c0_41 = arith.constant 0 : index
    %86 = vector.load %arg4[%c2_39, %c19_40, %c0_41] : memref<7x22x32xf32, #tpu.memory_space<vmem>>, vector<1x3x32xf32>
    %87 = vector.shape_cast %86 : vector<1x3x32xf32> to vector<3x32xf32>
    %88 = vector.shape_cast %25 : vector<3x32xf32> to vector<1x3x32xf32>
    tpu.vector_store %arg4[%c2_39, %c19_40, %c0_41], %88 {strides = array<i32>} : memref<7x22x32xf32, #tpu.memory_space<vmem>>, vector<1x3x32xf32>,
    %c0_i32_42 = arith.constant 0 : i32
    %89 = vector.broadcast %c0_i32_42 : i32 to vector<1x32xi32>
    %90 = arith.addi %24, %89 : vector<1x32xi32>
    %c0_i32_43 = arith.constant 0 : i32
    %91 = vector.broadcast %c0_i32_43 : i32 to vector<1x32xi32>
    %92 = arith.cmpi sge, %90, %91 : vector<1x32xi32>
    %c16_i32_44 = arith.constant 16 : i32
    %93 = vector.broadcast %c16_i32_44 : i32 to vector<1x32xi32>
    %94 = arith.cmpi slt, %90, %93 : vector<1x32xi32>
    %95 = arith.andi %92, %94 : vector<1x32xi1>
    %96 = vector.extract_strided_slice %7 {offsets = [0, 3], sizes = [16, 32], strides = [1, 1]} : vector<16x38xf32> to vector<16x32xf32>
    %cst_45 = arith.constant 0.000000e+00 : f32
    %97 = vector.shape_cast %95 : vector<1x32xi1> to vector<1x32xi1>
    %98 = vector.broadcast %97 : vector<1x32xi1> to vector<16x32xi1>
    %99 = vector.broadcast %cst_45 : f32 to vector<16x32xf32>
    %100 = arith.select %98, %96, %99 : vector<16x32xi1>, vector<16x32xf32>
    %c3_46 = arith.constant 3 : index
    %c0_47 = arith.constant 0 : index
    %c0_48 = arith.constant 0 : index
    %101 = vector.load %arg4[%c3_46, %c0_47, %c0_48] : memref<7x22x32xf32, #tpu.memory_space<vmem>>, vector<1x3x32xf32>
    %102 = vector.shape_cast %101 : vector<1x3x32xf32> to vector<3x32xf32>
    %103 = vector.shape_cast %25 : vector<3x32xf32> to vector<1x3x32xf32>
    tpu.vector_store %arg4[%c3_46, %c0_47, %c0_48], %103 {strides = array<i32>} : memref<7x22x32xf32, #tpu.memory_space<vmem>>, vector<1x3x32xf32>,
    %c3_49 = arith.constant 3 : index
    %c3_50 = arith.constant 3 : index
    %c0_51 = arith.constant 0 : index
    %104 = vector.load %arg4[%c3_49, %c3_50, %c0_51] : memref<7x22x32xf32, #tpu.memory_space<vmem>>, vector<1x16x32xf32>
    %105 = vector.shape_cast %104 : vector<1x16x32xf32> to vector<16x32xf32>
    %106 = vector.shape_cast %100 : vector<16x32xf32> to vector<1x16x32xf32>
    tpu.vector_store %arg4[%c3_49, %c3_50, %c0_51], %106 {strides = array<i32>} : memref<7x22x32xf32, #tpu.memory_space<vmem>>, vector<1x16x32xf32>,
    %c3_52 = arith.constant 3 : index
    %c19_53 = arith.constant 19 : index
    %c0_54 = arith.constant 0 : index
    %107 = vector.load %arg4[%c3_52, %c19_53, %c0_54] : memref<7x22x32xf32, #tpu.memory_space<vmem>>, vector<1x3x32xf32>
    %108 = vector.shape_cast %107 : vector<1x3x32xf32> to vector<3x32xf32>
    %109 = vector.shape_cast %25 : vector<3x32xf32> to vector<1x3x32xf32>
    tpu.vector_store %arg4[%c3_52, %c19_53, %c0_54], %109 {strides = array<i32>} : memref<7x22x32xf32, #tpu.memory_space<vmem>>, vector<1x3x32xf32>,
    %c1_i32_55 = arith.constant 1 : i32
    %110 = vector.broadcast %c1_i32_55 : i32 to vector<1x32xi32>
    %111 = arith.addi %24, %110 : vector<1x32xi32>
    %c0_i32_56 = arith.constant 0 : i32
    %112 = vector.broadcast %c0_i32_56 : i32 to vector<1x32xi32>
    %113 = arith.cmpi sge, %111, %112 : vector<1x32xi32>
    %c16_i32_57 = arith.constant 16 : i32
    %114 = vector.broadcast %c16_i32_57 : i32 to vector<1x32xi32>
    %115 = arith.cmpi slt, %111, %114 : vector<1x32xi32>
    %116 = arith.andi %113, %115 : vector<1x32xi1>
    %117 = vector.extract_strided_slice %7 {offsets = [0, 4], sizes = [16, 32], strides = [1, 1]} : vector<16x38xf32> to vector<16x32xf32>
    %cst_58 = arith.constant 0.000000e+00 : f32
    %118 = vector.shape_cast %116 : vector<1x32xi1> to vector<1x32xi1>
    %119 = vector.broadcast %118 : vector<1x32xi1> to vector<16x32xi1>
    %120 = vector.broadcast %cst_58 : f32 to vector<16x32xf32>
    %121 = arith.select %119, %117, %120 : vector<16x32xi1>, vector<16x32xf32>
    %c4 = arith.constant 4 : index
    %c0_59 = arith.constant 0 : index
    %c0_60 = arith.constant 0 : index
    %122 = vector.load %arg4[%c4, %c0_59, %c0_60] : memref<7x22x32xf32, #tpu.memory_space<vmem>>, vector<1x3x32xf32>
    %123 = vector.shape_cast %122 : vector<1x3x32xf32> to vector<3x32xf32>
    %124 = vector.shape_cast %25 : vector<3x32xf32> to vector<1x3x32xf32>
    tpu.vector_store %arg4[%c4, %c0_59, %c0_60], %124 {strides = array<i32>} : memref<7x22x32xf32, #tpu.memory_space<vmem>>, vector<1x3x32xf32>,
    %c4_61 = arith.constant 4 : index
    %c3_62 = arith.constant 3 : index
    %c0_63 = arith.constant 0 : index
    %125 = vector.load %arg4[%c4_61, %c3_62, %c0_63] : memref<7x22x32xf32, #tpu.memory_space<vmem>>, vector<1x16x32xf32>
    %126 = vector.shape_cast %125 : vector<1x16x32xf32> to vector<16x32xf32>
    %127 = vector.shape_cast %121 : vector<16x32xf32> to vector<1x16x32xf32>
    tpu.vector_store %arg4[%c4_61, %c3_62, %c0_63], %127 {strides = array<i32>} : memref<7x22x32xf32, #tpu.memory_space<vmem>>, vector<1x16x32xf32>,
    %c4_64 = arith.constant 4 : index
    %c19_65 = arith.constant 19 : index
    %c0_66 = arith.constant 0 : index
    %128 = vector.load %arg4[%c4_64, %c19_65, %c0_66] : memref<7x22x32xf32, #tpu.memory_space<vmem>>, vector<1x3x32xf32>
    %129 = vector.shape_cast %128 : vector<1x3x32xf32> to vector<3x32xf32>
    %130 = vector.shape_cast %25 : vector<3x32xf32> to vector<1x3x32xf32>
    tpu.vector_store %arg4[%c4_64, %c19_65, %c0_66], %130 {strides = array<i32>} : memref<7x22x32xf32, #tpu.memory_space<vmem>>, vector<1x3x32xf32>,
    %c2_i32 = arith.constant 2 : i32
    %131 = vector.broadcast %c2_i32 : i32 to vector<1x32xi32>
    %132 = arith.addi %24, %131 : vector<1x32xi32>
    %c0_i32_67 = arith.constant 0 : i32
    %133 = vector.broadcast %c0_i32_67 : i32 to vector<1x32xi32>
    %134 = arith.cmpi sge, %132, %133 : vector<1x32xi32>
    %c16_i32_68 = arith.constant 16 : i32
    %135 = vector.broadcast %c16_i32_68 : i32 to vector<1x32xi32>
    %136 = arith.cmpi slt, %132, %135 : vector<1x32xi32>
    %137 = arith.andi %134, %136 : vector<1x32xi1>
    %138 = vector.extract_strided_slice %7 {offsets = [0, 5], sizes = [16, 32], strides = [1, 1]} : vector<16x38xf32> to vector<16x32xf32>
    %cst_69 = arith.constant 0.000000e+00 : f32
    %139 = vector.shape_cast %137 : vector<1x32xi1> to vector<1x32xi1>
    %140 = vector.broadcast %139 : vector<1x32xi1> to vector<16x32xi1>
    %141 = vector.broadcast %cst_69 : f32 to vector<16x32xf32>
    %142 = arith.select %140, %138, %141 : vector<16x32xi1>, vector<16x32xf32>
    %c5 = arith.constant 5 : index
    %c0_70 = arith.constant 0 : index
    %c0_71 = arith.constant 0 : index
    %143 = vector.load %arg4[%c5, %c0_70, %c0_71] : memref<7x22x32xf32, #tpu.memory_space<vmem>>, vector<1x3x32xf32>
    %144 = vector.shape_cast %143 : vector<1x3x32xf32> to vector<3x32xf32>
    %145 = vector.shape_cast %25 : vector<3x32xf32> to vector<1x3x32xf32>
    tpu.vector_store %arg4[%c5, %c0_70, %c0_71], %145 {strides = array<i32>} : memref<7x22x32xf32, #tpu.memory_space<vmem>>, vector<1x3x32xf32>,
    %c5_72 = arith.constant 5 : index
    %c3_73 = arith.constant 3 : index
    %c0_74 = arith.constant 0 : index
    %146 = vector.load %arg4[%c5_72, %c3_73, %c0_74] : memref<7x22x32xf32, #tpu.memory_space<vmem>>, vector<1x16x32xf32>
    %147 = vector.shape_cast %146 : vector<1x16x32xf32> to vector<16x32xf32>
    %148 = vector.shape_cast %142 : vector<16x32xf32> to vector<1x16x32xf32>
    tpu.vector_store %arg4[%c5_72, %c3_73, %c0_74], %148 {strides = array<i32>} : memref<7x22x32xf32, #tpu.memory_space<vmem>>, vector<1x16x32xf32>,
    %c5_75 = arith.constant 5 : index
    %c19_76 = arith.constant 19 : index
    %c0_77 = arith.constant 0 : index
    %149 = vector.load %arg4[%c5_75, %c19_76, %c0_77] : memref<7x22x32xf32, #tpu.memory_space<vmem>>, vector<1x3x32xf32>
    %150 = vector.shape_cast %149 : vector<1x3x32xf32> to vector<3x32xf32>
    %151 = vector.shape_cast %25 : vector<3x32xf32> to vector<1x3x32xf32>
    tpu.vector_store %arg4[%c5_75, %c19_76, %c0_77], %151 {strides = array<i32>} : memref<7x22x32xf32, #tpu.memory_space<vmem>>, vector<1x3x32xf32>,
    %c3_i32 = arith.constant 3 : i32
    %152 = vector.broadcast %c3_i32 : i32 to vector<1x32xi32>
    %153 = arith.addi %24, %152 : vector<1x32xi32>
    %c0_i32_78 = arith.constant 0 : i32
    %154 = vector.broadcast %c0_i32_78 : i32 to vector<1x32xi32>
    %155 = arith.cmpi sge, %153, %154 : vector<1x32xi32>
    %c16_i32_79 = arith.constant 16 : i32
    %156 = vector.broadcast %c16_i32_79 : i32 to vector<1x32xi32>
    %157 = arith.cmpi slt, %153, %156 : vector<1x32xi32>
    %158 = arith.andi %155, %157 : vector<1x32xi1>
    %159 = vector.extract_strided_slice %7 {offsets = [0, 6], sizes = [16, 32], strides = [1, 1]} : vector<16x38xf32> to vector<16x32xf32>
    %cst_80 = arith.constant 0.000000e+00 : f32
    %160 = vector.shape_cast %158 : vector<1x32xi1> to vector<1x32xi1>
    %161 = vector.broadcast %160 : vector<1x32xi1> to vector<16x32xi1>
    %162 = vector.broadcast %cst_80 : f32 to vector<16x32xf32>
    %163 = arith.select %161, %159, %162 : vector<16x32xi1>, vector<16x32xf32>
    %c6 = arith.constant 6 : index
    %c0_81 = arith.constant 0 : index
    %c0_82 = arith.constant 0 : index
    %164 = vector.load %arg4[%c6, %c0_81, %c0_82] : memref<7x22x32xf32, #tpu.memory_space<vmem>>, vector<1x3x32xf32>
    %165 = vector.shape_cast %164 : vector<1x3x32xf32> to vector<3x32xf32>
    %166 = vector.shape_cast %25 : vector<3x32xf32> to vector<1x3x32xf32>
    tpu.vector_store %arg4[%c6, %c0_81, %c0_82], %166 {strides = array<i32>} : memref<7x22x32xf32, #tpu.memory_space<vmem>>, vector<1x3x32xf32>,
    %c6_83 = arith.constant 6 : index
    %c3_84 = arith.constant 3 : index
    %c0_85 = arith.constant 0 : index
    %167 = vector.load %arg4[%c6_83, %c3_84, %c0_85] : memref<7x22x32xf32, #tpu.memory_space<vmem>>, vector<1x16x32xf32>
    %168 = vector.shape_cast %167 : vector<1x16x32xf32> to vector<16x32xf32>
    %169 = vector.shape_cast %163 : vector<16x32xf32> to vector<1x16x32xf32>
    tpu.vector_store %arg4[%c6_83, %c3_84, %c0_85], %169 {strides = array<i32>} : memref<7x22x32xf32, #tpu.memory_space<vmem>>, vector<1x16x32xf32>,
    %c6_86 = arith.constant 6 : index
    %c19_87 = arith.constant 19 : index
    %c0_88 = arith.constant 0 : index
    %170 = vector.load %arg4[%c6_86, %c19_87, %c0_88] : memref<7x22x32xf32, #tpu.memory_space<vmem>>, vector<1x3x32xf32>
    %171 = vector.shape_cast %170 : vector<1x3x32xf32> to vector<3x32xf32>
    %172 = vector.shape_cast %25 : vector<3x32xf32> to vector<1x3x32xf32>
    tpu.vector_store %arg4[%c6_86, %c19_87, %c0_88], %172 {strides = array<i32>} : memref<7x22x32xf32, #tpu.memory_space<vmem>>, vector<1x3x32xf32>,
    %cst_89 = arith.constant 0.000000e+00 : f32
    %173 = vector.broadcast %cst_89 : f32 to vector<16x32xf32>
    %cst_90 = arith.constant 0.000000e+00 : f32
    %174 = vector.broadcast %cst_90 : f32 to vector<16x32xf32>
    %cst_91 = arith.constant 0.000000e+00 : f32
    %175 = vector.broadcast %cst_91 : f32 to vector<16x32xf32>
    %cst_92 = arith.constant 0.000000e+00 : f32
    %176 = vector.broadcast %cst_92 : f32 to vector<16x32xf32>
    %c0_93 = arith.constant 0 : index
    %c0_94 = arith.constant 0 : index
    %c0_95 = arith.constant 0 : index
    %177 = vector.load %arg4[%c0_93, %c0_94, %c0_95] : memref<7x22x32xf32, #tpu.memory_space<vmem>>, vector<1x16x32xf32>
    %178 = vector.shape_cast %177 : vector<1x16x32xf32> to vector<16x32xf32>
    %c0_96 = arith.constant 0 : index
    %c0_97 = arith.constant 0 : index
    %c0_98 = arith.constant 0 : index
    %179 = vector.load %arg1[%c0_96, %c0_97, %c0_98] : memref<49x1x32xf32, #tpu.memory_space<vmem>>, vector<1x1x32xf32>
    %180 = vector.shape_cast %179 : vector<1x1x32xf32> to vector<1x32xf32>
    %181 = vector.broadcast %180 : vector<1x32xf32> to vector<16x32xf32>
    %182 = arith.mulf %181, %178 : vector<16x32xf32>
    %183 = arith.addf %173, %182 : vector<16x32xf32>
    %c1_99 = arith.constant 1 : index
    %c0_100 = arith.constant 0 : index
    %c0_101 = arith.constant 0 : index
    %184 = vector.load %arg4[%c1_99, %c0_100, %c0_101] : memref<7x22x32xf32, #tpu.memory_space<vmem>>, vector<1x16x32xf32>
    %185 = vector.shape_cast %184 : vector<1x16x32xf32> to vector<16x32xf32>
    %c1_102 = arith.constant 1 : index
    %c0_103 = arith.constant 0 : index
    %c0_104 = arith.constant 0 : index
    %186 = vector.load %arg1[%c1_102, %c0_103, %c0_104] : memref<49x1x32xf32, #tpu.memory_space<vmem>>, vector<1x1x32xf32>
    %187 = vector.shape_cast %186 : vector<1x1x32xf32> to vector<1x32xf32>
    %188 = vector.broadcast %187 : vector<1x32xf32> to vector<16x32xf32>
    %189 = arith.mulf %188, %185 : vector<16x32xf32>
    %190 = arith.addf %174, %189 : vector<16x32xf32>
    %c2_105 = arith.constant 2 : index
    %c0_106 = arith.constant 0 : index
    %c0_107 = arith.constant 0 : index
    %191 = vector.load %arg4[%c2_105, %c0_106, %c0_107] : memref<7x22x32xf32, #tpu.memory_space<vmem>>, vector<1x16x32xf32>
    %192 = vector.shape_cast %191 : vector<1x16x32xf32> to vector<16x32xf32>
    %c2_108 = arith.constant 2 : index
    %c0_109 = arith.constant 0 : index
    %c0_110 = arith.constant 0 : index
    %193 = vector.load %arg1[%c2_108, %c0_109, %c0_110] : memref<49x1x32xf32, #tpu.memory_space<vmem>>, vector<1x1x32xf32>
    %194 = vector.shape_cast %193 : vector<1x1x32xf32> to vector<1x32xf32>
    %195 = vector.broadcast %194 : vector<1x32xf32> to vector<16x32xf32>
    %196 = arith.mulf %195, %192 : vector<16x32xf32>
    %197 = arith.addf %175, %196 : vector<16x32xf32>
    %c3_111 = arith.constant 3 : index
    %c0_112 = arith.constant 0 : index
    %c0_113 = arith.constant 0 : index
    %198 = vector.load %arg4[%c3_111, %c0_112, %c0_113] : memref<7x22x32xf32, #tpu.memory_space<vmem>>, vector<1x16x32xf32>
    %199 = vector.shape_cast %198 : vector<1x16x32xf32> to vector<16x32xf32>
    %c3_114 = arith.constant 3 : index
    %c0_115 = arith.constant 0 : index
    %c0_116 = arith.constant 0 : index
    %200 = vector.load %arg1[%c3_114, %c0_115, %c0_116] : memref<49x1x32xf32, #tpu.memory_space<vmem>>, vector<1x1x32xf32>
    %201 = vector.shape_cast %200 : vector<1x1x32xf32> to vector<1x32xf32>
    %202 = vector.broadcast %201 : vector<1x32xf32> to vector<16x32xf32>
    %203 = arith.mulf %202, %199 : vector<16x32xf32>
    %204 = arith.addf %176, %203 : vector<16x32xf32>
    %c4_117 = arith.constant 4 : index
    %c0_118 = arith.constant 0 : index
    %c0_119 = arith.constant 0 : index
    %205 = vector.load %arg4[%c4_117, %c0_118, %c0_119] : memref<7x22x32xf32, #tpu.memory_space<vmem>>, vector<1x16x32xf32>
    %206 = vector.shape_cast %205 : vector<1x16x32xf32> to vector<16x32xf32>
    %c4_120 = arith.constant 4 : index
    %c0_121 = arith.constant 0 : index
    %c0_122 = arith.constant 0 : index
    %207 = vector.load %arg1[%c4_120, %c0_121, %c0_122] : memref<49x1x32xf32, #tpu.memory_space<vmem>>, vector<1x1x32xf32>
    %208 = vector.shape_cast %207 : vector<1x1x32xf32> to vector<1x32xf32>
    %209 = vector.broadcast %208 : vector<1x32xf32> to vector<16x32xf32>
    %210 = arith.mulf %209, %206 : vector<16x32xf32>
    %211 = arith.addf %183, %210 : vector<16x32xf32>
    %c5_123 = arith.constant 5 : index
    %c0_124 = arith.constant 0 : index
    %c0_125 = arith.constant 0 : index
    %212 = vector.load %arg4[%c5_123, %c0_124, %c0_125] : memref<7x22x32xf32, #tpu.memory_space<vmem>>, vector<1x16x32xf32>
    %213 = vector.shape_cast %212 : vector<1x16x32xf32> to vector<16x32xf32>
    %c5_126 = arith.constant 5 : index
    %c0_127 = arith.constant 0 : index
    %c0_128 = arith.constant 0 : index
    %214 = vector.load %arg1[%c5_126, %c0_127, %c0_128] : memref<49x1x32xf32, #tpu.memory_space<vmem>>, vector<1x1x32xf32>
    %215 = vector.shape_cast %214 : vector<1x1x32xf32> to vector<1x32xf32>
    %216 = vector.broadcast %215 : vector<1x32xf32> to vector<16x32xf32>
    %217 = arith.mulf %216, %213 : vector<16x32xf32>
    %218 = arith.addf %190, %217 : vector<16x32xf32>
    %c6_129 = arith.constant 6 : index
    %c0_130 = arith.constant 0 : index
    %c0_131 = arith.constant 0 : index
    %219 = vector.load %arg4[%c6_129, %c0_130, %c0_131] : memref<7x22x32xf32, #tpu.memory_space<vmem>>, vector<1x16x32xf32>
    %220 = vector.shape_cast %219 : vector<1x16x32xf32> to vector<16x32xf32>
    %c6_132 = arith.constant 6 : index
    %c0_133 = arith.constant 0 : index
    %c0_134 = arith.constant 0 : index
    %221 = vector.load %arg1[%c6_132, %c0_133, %c0_134] : memref<49x1x32xf32, #tpu.memory_space<vmem>>, vector<1x1x32xf32>
    %222 = vector.shape_cast %221 : vector<1x1x32xf32> to vector<1x32xf32>
    %223 = vector.broadcast %222 : vector<1x32xf32> to vector<16x32xf32>
    %224 = arith.mulf %223, %220 : vector<16x32xf32>
    %225 = arith.addf %197, %224 : vector<16x32xf32>
    %c0_135 = arith.constant 0 : index
    %c1_136 = arith.constant 1 : index
    %c0_137 = arith.constant 0 : index
    %226 = vector.load %arg4[%c0_135, %c1_136, %c0_137] : memref<7x22x32xf32, #tpu.memory_space<vmem>>, vector<1x16x32xf32>
    %227 = vector.shape_cast %226 : vector<1x16x32xf32> to vector<16x32xf32>
    %c7 = arith.constant 7 : index
    %c0_138 = arith.constant 0 : index
    %c0_139 = arith.constant 0 : index
    %228 = vector.load %arg1[%c7, %c0_138, %c0_139] : memref<49x1x32xf32, #tpu.memory_space<vmem>>, vector<1x1x32xf32>
    %229 = vector.shape_cast %228 : vector<1x1x32xf32> to vector<1x32xf32>
    %230 = vector.broadcast %229 : vector<1x32xf32> to vector<16x32xf32>
    %231 = arith.mulf %230, %227 : vector<16x32xf32>
    %232 = arith.addf %204, %231 : vector<16x32xf32>
    %c1_140 = arith.constant 1 : index
    %c1_141 = arith.constant 1 : index
    %c0_142 = arith.constant 0 : index
    %233 = vector.load %arg4[%c1_140, %c1_141, %c0_142] : memref<7x22x32xf32, #tpu.memory_space<vmem>>, vector<1x16x32xf32>
    %234 = vector.shape_cast %233 : vector<1x16x32xf32> to vector<16x32xf32>
    %c8 = arith.constant 8 : index
    %c0_143 = arith.constant 0 : index
    %c0_144 = arith.constant 0 : index
    %235 = vector.load %arg1[%c8, %c0_143, %c0_144] : memref<49x1x32xf32, #tpu.memory_space<vmem>>, vector<1x1x32xf32>
    %236 = vector.shape_cast %235 : vector<1x1x32xf32> to vector<1x32xf32>
    %237 = vector.broadcast %236 : vector<1x32xf32> to vector<16x32xf32>
    %238 = arith.mulf %237, %234 : vector<16x32xf32>
    %239 = arith.addf %211, %238 : vector<16x32xf32>
    %c2_145 = arith.constant 2 : index
    %c1_146 = arith.constant 1 : index
    %c0_147 = arith.constant 0 : index
    %240 = vector.load %arg4[%c2_145, %c1_146, %c0_147] : memref<7x22x32xf32, #tpu.memory_space<vmem>>, vector<1x16x32xf32>
    %241 = vector.shape_cast %240 : vector<1x16x32xf32> to vector<16x32xf32>
    %c9 = arith.constant 9 : index
    %c0_148 = arith.constant 0 : index
    %c0_149 = arith.constant 0 : index
    %242 = vector.load %arg1[%c9, %c0_148, %c0_149] : memref<49x1x32xf32, #tpu.memory_space<vmem>>, vector<1x1x32xf32>
    %243 = vector.shape_cast %242 : vector<1x1x32xf32> to vector<1x32xf32>
    %244 = vector.broadcast %243 : vector<1x32xf32> to vector<16x32xf32>
    %245 = arith.mulf %244, %241 : vector<16x32xf32>
    %246 = arith.addf %218, %245 : vector<16x32xf32>
    %c3_150 = arith.constant 3 : index
    %c1_151 = arith.constant 1 : index
    %c0_152 = arith.constant 0 : index
    %247 = vector.load %arg4[%c3_150, %c1_151, %c0_152] : memref<7x22x32xf32, #tpu.memory_space<vmem>>, vector<1x16x32xf32>
    %248 = vector.shape_cast %247 : vector<1x16x32xf32> to vector<16x32xf32>
    %c10 = arith.constant 10 : index
    %c0_153 = arith.constant 0 : index
    %c0_154 = arith.constant 0 : index
    %249 = vector.load %arg1[%c10, %c0_153, %c0_154] : memref<49x1x32xf32, #tpu.memory_space<vmem>>, vector<1x1x32xf32>
    %250 = vector.shape_cast %249 : vector<1x1x32xf32> to vector<1x32xf32>
    %251 = vector.broadcast %250 : vector<1x32xf32> to vector<16x32xf32>
    %252 = arith.mulf %251, %248 : vector<16x32xf32>
    %253 = arith.addf %225, %252 : vector<16x32xf32>
    %c4_155 = arith.constant 4 : index
    %c1_156 = arith.constant 1 : index
    %c0_157 = arith.constant 0 : index
    %254 = vector.load %arg4[%c4_155, %c1_156, %c0_157] : memref<7x22x32xf32, #tpu.memory_space<vmem>>, vector<1x16x32xf32>
    %255 = vector.shape_cast %254 : vector<1x16x32xf32> to vector<16x32xf32>
    %c11 = arith.constant 11 : index
    %c0_158 = arith.constant 0 : index
    %c0_159 = arith.constant 0 : index
    %256 = vector.load %arg1[%c11, %c0_158, %c0_159] : memref<49x1x32xf32, #tpu.memory_space<vmem>>, vector<1x1x32xf32>
    %257 = vector.shape_cast %256 : vector<1x1x32xf32> to vector<1x32xf32>
    %258 = vector.broadcast %257 : vector<1x32xf32> to vector<16x32xf32>
    %259 = arith.mulf %258, %255 : vector<16x32xf32>
    %260 = arith.addf %232, %259 : vector<16x32xf32>
    %c5_160 = arith.constant 5 : index
    %c1_161 = arith.constant 1 : index
    %c0_162 = arith.constant 0 : index
    %261 = vector.load %arg4[%c5_160, %c1_161, %c0_162] : memref<7x22x32xf32, #tpu.memory_space<vmem>>, vector<1x16x32xf32>
    %262 = vector.shape_cast %261 : vector<1x16x32xf32> to vector<16x32xf32>
    %c12 = arith.constant 12 : index
    %c0_163 = arith.constant 0 : index
    %c0_164 = arith.constant 0 : index
    %263 = vector.load %arg1[%c12, %c0_163, %c0_164] : memref<49x1x32xf32, #tpu.memory_space<vmem>>, vector<1x1x32xf32>
    %264 = vector.shape_cast %263 : vector<1x1x32xf32> to vector<1x32xf32>
    %265 = vector.broadcast %264 : vector<1x32xf32> to vector<16x32xf32>
    %266 = arith.mulf %265, %262 : vector<16x32xf32>
    %267 = arith.addf %239, %266 : vector<16x32xf32>
    %c6_165 = arith.constant 6 : index
    %c1_166 = arith.constant 1 : index
    %c0_167 = arith.constant 0 : index
    %268 = vector.load %arg4[%c6_165, %c1_166, %c0_167] : memref<7x22x32xf32, #tpu.memory_space<vmem>>, vector<1x16x32xf32>
    %269 = vector.shape_cast %268 : vector<1x16x32xf32> to vector<16x32xf32>
    %c13 = arith.constant 13 : index
    %c0_168 = arith.constant 0 : index
    %c0_169 = arith.constant 0 : index
    %270 = vector.load %arg1[%c13, %c0_168, %c0_169] : memref<49x1x32xf32, #tpu.memory_space<vmem>>, vector<1x1x32xf32>
    %271 = vector.shape_cast %270 : vector<1x1x32xf32> to vector<1x32xf32>
    %272 = vector.broadcast %271 : vector<1x32xf32> to vector<16x32xf32>
    %273 = arith.mulf %272, %269 : vector<16x32xf32>
    %274 = arith.addf %246, %273 : vector<16x32xf32>
    %c0_170 = arith.constant 0 : index
    %c2_171 = arith.constant 2 : index
    %c0_172 = arith.constant 0 : index
    %275 = vector.load %arg4[%c0_170, %c2_171, %c0_172] : memref<7x22x32xf32, #tpu.memory_space<vmem>>, vector<1x16x32xf32>
    %276 = vector.shape_cast %275 : vector<1x16x32xf32> to vector<16x32xf32>
    %c14 = arith.constant 14 : index
    %c0_173 = arith.constant 0 : index
    %c0_174 = arith.constant 0 : index
    %277 = vector.load %arg1[%c14, %c0_173, %c0_174] : memref<49x1x32xf32, #tpu.memory_space<vmem>>, vector<1x1x32xf32>
    %278 = vector.shape_cast %277 : vector<1x1x32xf32> to vector<1x32xf32>
    %279 = vector.broadcast %278 : vector<1x32xf32> to vector<16x32xf32>
    %280 = arith.mulf %279, %276 : vector<16x32xf32>
    %281 = arith.addf %253, %280 : vector<16x32xf32>
    %c1_175 = arith.constant 1 : index
    %c2_176 = arith.constant 2 : index
    %c0_177 = arith.constant 0 : index
    %282 = vector.load %arg4[%c1_175, %c2_176, %c0_177] : memref<7x22x32xf32, #tpu.memory_space<vmem>>, vector<1x16x32xf32>
    %283 = vector.shape_cast %282 : vector<1x16x32xf32> to vector<16x32xf32>
    %c15 = arith.constant 15 : index
    %c0_178 = arith.constant 0 : index
    %c0_179 = arith.constant 0 : index
    %284 = vector.load %arg1[%c15, %c0_178, %c0_179] : memref<49x1x32xf32, #tpu.memory_space<vmem>>, vector<1x1x32xf32>
    %285 = vector.shape_cast %284 : vector<1x1x32xf32> to vector<1x32xf32>
    %286 = vector.broadcast %285 : vector<1x32xf32> to vector<16x32xf32>
    %287 = arith.mulf %286, %283 : vector<16x32xf32>
    %288 = arith.addf %260, %287 : vector<16x32xf32>
    %c2_180 = arith.constant 2 : index
    %c2_181 = arith.constant 2 : index
    %c0_182 = arith.constant 0 : index
    %289 = vector.load %arg4[%c2_180, %c2_181, %c0_182] : memref<7x22x32xf32, #tpu.memory_space<vmem>>, vector<1x16x32xf32>
    %290 = vector.shape_cast %289 : vector<1x16x32xf32> to vector<16x32xf32>
    %c16 = arith.constant 16 : index
    %c0_183 = arith.constant 0 : index
    %c0_184 = arith.constant 0 : index
    %291 = vector.load %arg1[%c16, %c0_183, %c0_184] : memref<49x1x32xf32, #tpu.memory_space<vmem>>, vector<1x1x32xf32>
    %292 = vector.shape_cast %291 : vector<1x1x32xf32> to vector<1x32xf32>
    %293 = vector.broadcast %292 : vector<1x32xf32> to vector<16x32xf32>
    %294 = arith.mulf %293, %290 : vector<16x32xf32>
    %295 = arith.addf %267, %294 : vector<16x32xf32>
    %c3_185 = arith.constant 3 : index
    %c2_186 = arith.constant 2 : index
    %c0_187 = arith.constant 0 : index
    %296 = vector.load %arg4[%c3_185, %c2_186, %c0_187] : memref<7x22x32xf32, #tpu.memory_space<vmem>>, vector<1x16x32xf32>
    %297 = vector.shape_cast %296 : vector<1x16x32xf32> to vector<16x32xf32>
    %c17 = arith.constant 17 : index
    %c0_188 = arith.constant 0 : index
    %c0_189 = arith.constant 0 : index
    %298 = vector.load %arg1[%c17, %c0_188, %c0_189] : memref<49x1x32xf32, #tpu.memory_space<vmem>>, vector<1x1x32xf32>
    %299 = vector.shape_cast %298 : vector<1x1x32xf32> to vector<1x32xf32>
    %300 = vector.broadcast %299 : vector<1x32xf32> to vector<16x32xf32>
    %301 = arith.mulf %300, %297 : vector<16x32xf32>
    %302 = arith.addf %274, %301 : vector<16x32xf32>
    %c4_190 = arith.constant 4 : index
    %c2_191 = arith.constant 2 : index
    %c0_192 = arith.constant 0 : index
    %303 = vector.load %arg4[%c4_190, %c2_191, %c0_192] : memref<7x22x32xf32, #tpu.memory_space<vmem>>, vector<1x16x32xf32>
    %304 = vector.shape_cast %303 : vector<1x16x32xf32> to vector<16x32xf32>
    %c18 = arith.constant 18 : index
    %c0_193 = arith.constant 0 : index
    %c0_194 = arith.constant 0 : index
    %305 = vector.load %arg1[%c18, %c0_193, %c0_194] : memref<49x1x32xf32, #tpu.memory_space<vmem>>, vector<1x1x32xf32>
    %306 = vector.shape_cast %305 : vector<1x1x32xf32> to vector<1x32xf32>
    %307 = vector.broadcast %306 : vector<1x32xf32> to vector<16x32xf32>
    %308 = arith.mulf %307, %304 : vector<16x32xf32>
    %309 = arith.addf %281, %308 : vector<16x32xf32>
    %c5_195 = arith.constant 5 : index
    %c2_196 = arith.constant 2 : index
    %c0_197 = arith.constant 0 : index
    %310 = vector.load %arg4[%c5_195, %c2_196, %c0_197] : memref<7x22x32xf32, #tpu.memory_space<vmem>>, vector<1x16x32xf32>
    %311 = vector.shape_cast %310 : vector<1x16x32xf32> to vector<16x32xf32>
    %c19_198 = arith.constant 19 : index
    %c0_199 = arith.constant 0 : index
    %c0_200 = arith.constant 0 : index
    %312 = vector.load %arg1[%c19_198, %c0_199, %c0_200] : memref<49x1x32xf32, #tpu.memory_space<vmem>>, vector<1x1x32xf32>
    %313 = vector.shape_cast %312 : vector<1x1x32xf32> to vector<1x32xf32>
    %314 = vector.broadcast %313 : vector<1x32xf32> to vector<16x32xf32>
    %315 = arith.mulf %314, %311 : vector<16x32xf32>
    %316 = arith.addf %288, %315 : vector<16x32xf32>
    %c6_201 = arith.constant 6 : index
    %c2_202 = arith.constant 2 : index
    %c0_203 = arith.constant 0 : index
    %317 = vector.load %arg4[%c6_201, %c2_202, %c0_203] : memref<7x22x32xf32, #tpu.memory_space<vmem>>, vector<1x16x32xf32>
    %318 = vector.shape_cast %317 : vector<1x16x32xf32> to vector<16x32xf32>
    %c20 = arith.constant 20 : index
    %c0_204 = arith.constant 0 : index
    %c0_205 = arith.constant 0 : index
    %319 = vector.load %arg1[%c20, %c0_204, %c0_205] : memref<49x1x32xf32, #tpu.memory_space<vmem>>, vector<1x1x32xf32>
    %320 = vector.shape_cast %319 : vector<1x1x32xf32> to vector<1x32xf32>
    %321 = vector.broadcast %320 : vector<1x32xf32> to vector<16x32xf32>
    %322 = arith.mulf %321, %318 : vector<16x32xf32>
    %323 = arith.addf %295, %322 : vector<16x32xf32>
    %c0_206 = arith.constant 0 : index
    %c3_207 = arith.constant 3 : index
    %c0_208 = arith.constant 0 : index
    %324 = vector.load %arg4[%c0_206, %c3_207, %c0_208] : memref<7x22x32xf32, #tpu.memory_space<vmem>>, vector<1x16x32xf32>
    %325 = vector.shape_cast %324 : vector<1x16x32xf32> to vector<16x32xf32>
    %c21 = arith.constant 21 : index
    %c0_209 = arith.constant 0 : index
    %c0_210 = arith.constant 0 : index
    %326 = vector.load %arg1[%c21, %c0_209, %c0_210] : memref<49x1x32xf32, #tpu.memory_space<vmem>>, vector<1x1x32xf32>
    %327 = vector.shape_cast %326 : vector<1x1x32xf32> to vector<1x32xf32>
    %328 = vector.broadcast %327 : vector<1x32xf32> to vector<16x32xf32>
    %329 = arith.mulf %328, %325 : vector<16x32xf32>
    %330 = arith.addf %302, %329 : vector<16x32xf32>
    %c1_211 = arith.constant 1 : index
    %c3_212 = arith.constant 3 : index
    %c0_213 = arith.constant 0 : index
    %331 = vector.load %arg4[%c1_211, %c3_212, %c0_213] : memref<7x22x32xf32, #tpu.memory_space<vmem>>, vector<1x16x32xf32>
    %332 = vector.shape_cast %331 : vector<1x16x32xf32> to vector<16x32xf32>
    %c22 = arith.constant 22 : index
    %c0_214 = arith.constant 0 : index
    %c0_215 = arith.constant 0 : index
    %333 = vector.load %arg1[%c22, %c0_214, %c0_215] : memref<49x1x32xf32, #tpu.memory_space<vmem>>, vector<1x1x32xf32>
    %334 = vector.shape_cast %333 : vector<1x1x32xf32> to vector<1x32xf32>
    %335 = vector.broadcast %334 : vector<1x32xf32> to vector<16x32xf32>
    %336 = arith.mulf %335, %332 : vector<16x32xf32>
    %337 = arith.addf %309, %336 : vector<16x32xf32>
    %c2_216 = arith.constant 2 : index
    %c3_217 = arith.constant 3 : index
    %c0_218 = arith.constant 0 : index
    %338 = vector.load %arg4[%c2_216, %c3_217, %c0_218] : memref<7x22x32xf32, #tpu.memory_space<vmem>>, vector<1x16x32xf32>
    %339 = vector.shape_cast %338 : vector<1x16x32xf32> to vector<16x32xf32>
    %c23 = arith.constant 23 : index
    %c0_219 = arith.constant 0 : index
    %c0_220 = arith.constant 0 : index
    %340 = vector.load %arg1[%c23, %c0_219, %c0_220] : memref<49x1x32xf32, #tpu.memory_space<vmem>>, vector<1x1x32xf32>
    %341 = vector.shape_cast %340 : vector<1x1x32xf32> to vector<1x32xf32>
    %342 = vector.broadcast %341 : vector<1x32xf32> to vector<16x32xf32>
    %343 = arith.mulf %342, %339 : vector<16x32xf32>
    %344 = arith.addf %316, %343 : vector<16x32xf32>
    %c3_221 = arith.constant 3 : index
    %c3_222 = arith.constant 3 : index
    %c0_223 = arith.constant 0 : index
    %345 = vector.load %arg4[%c3_221, %c3_222, %c0_223] : memref<7x22x32xf32, #tpu.memory_space<vmem>>, vector<1x16x32xf32>
    %346 = vector.shape_cast %345 : vector<1x16x32xf32> to vector<16x32xf32>
    %c24 = arith.constant 24 : index
    %c0_224 = arith.constant 0 : index
    %c0_225 = arith.constant 0 : index
    %347 = vector.load %arg1[%c24, %c0_224, %c0_225] : memref<49x1x32xf32, #tpu.memory_space<vmem>>, vector<1x1x32xf32>
    %348 = vector.shape_cast %347 : vector<1x1x32xf32> to vector<1x32xf32>
    %349 = vector.broadcast %348 : vector<1x32xf32> to vector<16x32xf32>
    %350 = arith.mulf %349, %346 : vector<16x32xf32>
    %351 = arith.addf %323, %350 : vector<16x32xf32>
    %c4_226 = arith.constant 4 : index
    %c3_227 = arith.constant 3 : index
    %c0_228 = arith.constant 0 : index
    %352 = vector.load %arg4[%c4_226, %c3_227, %c0_228] : memref<7x22x32xf32, #tpu.memory_space<vmem>>, vector<1x16x32xf32>
    %353 = vector.shape_cast %352 : vector<1x16x32xf32> to vector<16x32xf32>
    %c25 = arith.constant 25 : index
    %c0_229 = arith.constant 0 : index
    %c0_230 = arith.constant 0 : index
    %354 = vector.load %arg1[%c25, %c0_229, %c0_230] : memref<49x1x32xf32, #tpu.memory_space<vmem>>, vector<1x1x32xf32>
    %355 = vector.shape_cast %354 : vector<1x1x32xf32> to vector<1x32xf32>
    %356 = vector.broadcast %355 : vector<1x32xf32> to vector<16x32xf32>
    %357 = arith.mulf %356, %353 : vector<16x32xf32>
    %358 = arith.addf %330, %357 : vector<16x32xf32>
    %c5_231 = arith.constant 5 : index
    %c3_232 = arith.constant 3 : index
    %c0_233 = arith.constant 0 : index
    %359 = vector.load %arg4[%c5_231, %c3_232, %c0_233] : memref<7x22x32xf32, #tpu.memory_space<vmem>>, vector<1x16x32xf32>
    %360 = vector.shape_cast %359 : vector<1x16x32xf32> to vector<16x32xf32>
    %c26 = arith.constant 26 : index
    %c0_234 = arith.constant 0 : index
    %c0_235 = arith.constant 0 : index
    %361 = vector.load %arg1[%c26, %c0_234, %c0_235] : memref<49x1x32xf32, #tpu.memory_space<vmem>>, vector<1x1x32xf32>
    %362 = vector.shape_cast %361 : vector<1x1x32xf32> to vector<1x32xf32>
    %363 = vector.broadcast %362 : vector<1x32xf32> to vector<16x32xf32>
    %364 = arith.mulf %363, %360 : vector<16x32xf32>
    %365 = arith.addf %337, %364 : vector<16x32xf32>
    %c6_236 = arith.constant 6 : index
    %c3_237 = arith.constant 3 : index
    %c0_238 = arith.constant 0 : index
    %366 = vector.load %arg4[%c6_236, %c3_237, %c0_238] : memref<7x22x32xf32, #tpu.memory_space<vmem>>, vector<1x16x32xf32>
    %367 = vector.shape_cast %366 : vector<1x16x32xf32> to vector<16x32xf32>
    %c27 = arith.constant 27 : index
    %c0_239 = arith.constant 0 : index
    %c0_240 = arith.constant 0 : index
    %368 = vector.load %arg1[%c27, %c0_239, %c0_240] : memref<49x1x32xf32, #tpu.memory_space<vmem>>, vector<1x1x32xf32>
    %369 = vector.shape_cast %368 : vector<1x1x32xf32> to vector<1x32xf32>
    %370 = vector.broadcast %369 : vector<1x32xf32> to vector<16x32xf32>
    %371 = arith.mulf %370, %367 : vector<16x32xf32>
    %372 = arith.addf %344, %371 : vector<16x32xf32>
    %c0_241 = arith.constant 0 : index
    %c4_242 = arith.constant 4 : index
    %c0_243 = arith.constant 0 : index
    %373 = vector.load %arg4[%c0_241, %c4_242, %c0_243] : memref<7x22x32xf32, #tpu.memory_space<vmem>>, vector<1x16x32xf32>
    %374 = vector.shape_cast %373 : vector<1x16x32xf32> to vector<16x32xf32>
    %c28 = arith.constant 28 : index
    %c0_244 = arith.constant 0 : index
    %c0_245 = arith.constant 0 : index
    %375 = vector.load %arg1[%c28, %c0_244, %c0_245] : memref<49x1x32xf32, #tpu.memory_space<vmem>>, vector<1x1x32xf32>
    %376 = vector.shape_cast %375 : vector<1x1x32xf32> to vector<1x32xf32>
    %377 = vector.broadcast %376 : vector<1x32xf32> to vector<16x32xf32>
    %378 = arith.mulf %377, %374 : vector<16x32xf32>
    %379 = arith.addf %351, %378 : vector<16x32xf32>
    %c1_246 = arith.constant 1 : index
    %c4_247 = arith.constant 4 : index
    %c0_248 = arith.constant 0 : index
    %380 = vector.load %arg4[%c1_246, %c4_247, %c0_248] : memref<7x22x32xf32, #tpu.memory_space<vmem>>, vector<1x16x32xf32>
    %381 = vector.shape_cast %380 : vector<1x16x32xf32> to vector<16x32xf32>
    %c29 = arith.constant 29 : index
    %c0_249 = arith.constant 0 : index
    %c0_250 = arith.constant 0 : index
    %382 = vector.load %arg1[%c29, %c0_249, %c0_250] : memref<49x1x32xf32, #tpu.memory_space<vmem>>, vector<1x1x32xf32>
    %383 = vector.shape_cast %382 : vector<1x1x32xf32> to vector<1x32xf32>
    %384 = vector.broadcast %383 : vector<1x32xf32> to vector<16x32xf32>
    %385 = arith.mulf %384, %381 : vector<16x32xf32>
    %386 = arith.addf %358, %385 : vector<16x32xf32>
    %c2_251 = arith.constant 2 : index
    %c4_252 = arith.constant 4 : index
    %c0_253 = arith.constant 0 : index
    %387 = vector.load %arg4[%c2_251, %c4_252, %c0_253] : memref<7x22x32xf32, #tpu.memory_space<vmem>>, vector<1x16x32xf32>
    %388 = vector.shape_cast %387 : vector<1x16x32xf32> to vector<16x32xf32>
    %c30 = arith.constant 30 : index
    %c0_254 = arith.constant 0 : index
    %c0_255 = arith.constant 0 : index
    %389 = vector.load %arg1[%c30, %c0_254, %c0_255] : memref<49x1x32xf32, #tpu.memory_space<vmem>>, vector<1x1x32xf32>
    %390 = vector.shape_cast %389 : vector<1x1x32xf32> to vector<1x32xf32>
    %391 = vector.broadcast %390 : vector<1x32xf32> to vector<16x32xf32>
    %392 = arith.mulf %391, %388 : vector<16x32xf32>
    %393 = arith.addf %365, %392 : vector<16x32xf32>
    %c3_256 = arith.constant 3 : index
    %c4_257 = arith.constant 4 : index
    %c0_258 = arith.constant 0 : index
    %394 = vector.load %arg4[%c3_256, %c4_257, %c0_258] : memref<7x22x32xf32, #tpu.memory_space<vmem>>, vector<1x16x32xf32>
    %395 = vector.shape_cast %394 : vector<1x16x32xf32> to vector<16x32xf32>
    %c31 = arith.constant 31 : index
    %c0_259 = arith.constant 0 : index
    %c0_260 = arith.constant 0 : index
    %396 = vector.load %arg1[%c31, %c0_259, %c0_260] : memref<49x1x32xf32, #tpu.memory_space<vmem>>, vector<1x1x32xf32>
    %397 = vector.shape_cast %396 : vector<1x1x32xf32> to vector<1x32xf32>
    %398 = vector.broadcast %397 : vector<1x32xf32> to vector<16x32xf32>
    %399 = arith.mulf %398, %395 : vector<16x32xf32>
    %400 = arith.addf %372, %399 : vector<16x32xf32>
    %c4_261 = arith.constant 4 : index
    %c4_262 = arith.constant 4 : index
    %c0_263 = arith.constant 0 : index
    %401 = vector.load %arg4[%c4_261, %c4_262, %c0_263] : memref<7x22x32xf32, #tpu.memory_space<vmem>>, vector<1x16x32xf32>
    %402 = vector.shape_cast %401 : vector<1x16x32xf32> to vector<16x32xf32>
    %c32 = arith.constant 32 : index
    %c0_264 = arith.constant 0 : index
    %c0_265 = arith.constant 0 : index
    %403 = vector.load %arg1[%c32, %c0_264, %c0_265] : memref<49x1x32xf32, #tpu.memory_space<vmem>>, vector<1x1x32xf32>
    %404 = vector.shape_cast %403 : vector<1x1x32xf32> to vector<1x32xf32>
    %405 = vector.broadcast %404 : vector<1x32xf32> to vector<16x32xf32>
    %406 = arith.mulf %405, %402 : vector<16x32xf32>
    %407 = arith.addf %379, %406 : vector<16x32xf32>
    %c5_266 = arith.constant 5 : index
    %c4_267 = arith.constant 4 : index
    %c0_268 = arith.constant 0 : index
    %408 = vector.load %arg4[%c5_266, %c4_267, %c0_268] : memref<7x22x32xf32, #tpu.memory_space<vmem>>, vector<1x16x32xf32>
    %409 = vector.shape_cast %408 : vector<1x16x32xf32> to vector<16x32xf32>
    %c33 = arith.constant 33 : index
    %c0_269 = arith.constant 0 : index
    %c0_270 = arith.constant 0 : index
    %410 = vector.load %arg1[%c33, %c0_269, %c0_270] : memref<49x1x32xf32, #tpu.memory_space<vmem>>, vector<1x1x32xf32>
    %411 = vector.shape_cast %410 : vector<1x1x32xf32> to vector<1x32xf32>
    %412 = vector.broadcast %411 : vector<1x32xf32> to vector<16x32xf32>
    %413 = arith.mulf %412, %409 : vector<16x32xf32>
    %414 = arith.addf %386, %413 : vector<16x32xf32>
    %c6_271 = arith.constant 6 : index
    %c4_272 = arith.constant 4 : index
    %c0_273 = arith.constant 0 : index
    %415 = vector.load %arg4[%c6_271, %c4_272, %c0_273] : memref<7x22x32xf32, #tpu.memory_space<vmem>>, vector<1x16x32xf32>
    %416 = vector.shape_cast %415 : vector<1x16x32xf32> to vector<16x32xf32>
    %c34 = arith.constant 34 : index
    %c0_274 = arith.constant 0 : index
    %c0_275 = arith.constant 0 : index
    %417 = vector.load %arg1[%c34, %c0_274, %c0_275] : memref<49x1x32xf32, #tpu.memory_space<vmem>>, vector<1x1x32xf32>
    %418 = vector.shape_cast %417 : vector<1x1x32xf32> to vector<1x32xf32>
    %419 = vector.broadcast %418 : vector<1x32xf32> to vector<16x32xf32>
    %420 = arith.mulf %419, %416 : vector<16x32xf32>
    %421 = arith.addf %393, %420 : vector<16x32xf32>
    %c0_276 = arith.constant 0 : index
    %c5_277 = arith.constant 5 : index
    %c0_278 = arith.constant 0 : index
    %422 = vector.load %arg4[%c0_276, %c5_277, %c0_278] : memref<7x22x32xf32, #tpu.memory_space<vmem>>, vector<1x16x32xf32>
    %423 = vector.shape_cast %422 : vector<1x16x32xf32> to vector<16x32xf32>
    %c35 = arith.constant 35 : index
    %c0_279 = arith.constant 0 : index
    %c0_280 = arith.constant 0 : index
    %424 = vector.load %arg1[%c35, %c0_279, %c0_280] : memref<49x1x32xf32, #tpu.memory_space<vmem>>, vector<1x1x32xf32>
    %425 = vector.shape_cast %424 : vector<1x1x32xf32> to vector<1x32xf32>
    %426 = vector.broadcast %425 : vector<1x32xf32> to vector<16x32xf32>
    %427 = arith.mulf %426, %423 : vector<16x32xf32>
    %428 = arith.addf %400, %427 : vector<16x32xf32>
    %c1_281 = arith.constant 1 : index
    %c5_282 = arith.constant 5 : index
    %c0_283 = arith.constant 0 : index
    %429 = vector.load %arg4[%c1_281, %c5_282, %c0_283] : memref<7x22x32xf32, #tpu.memory_space<vmem>>, vector<1x16x32xf32>
    %430 = vector.shape_cast %429 : vector<1x16x32xf32> to vector<16x32xf32>
    %c36 = arith.constant 36 : index
    %c0_284 = arith.constant 0 : index
    %c0_285 = arith.constant 0 : index
    %431 = vector.load %arg1[%c36, %c0_284, %c0_285] : memref<49x1x32xf32, #tpu.memory_space<vmem>>, vector<1x1x32xf32>
    %432 = vector.shape_cast %431 : vector<1x1x32xf32> to vector<1x32xf32>
    %433 = vector.broadcast %432 : vector<1x32xf32> to vector<16x32xf32>
    %434 = arith.mulf %433, %430 : vector<16x32xf32>
    %435 = arith.addf %407, %434 : vector<16x32xf32>
    %c2_286 = arith.constant 2 : index
    %c5_287 = arith.constant 5 : index
    %c0_288 = arith.constant 0 : index
    %436 = vector.load %arg4[%c2_286, %c5_287, %c0_288] : memref<7x22x32xf32, #tpu.memory_space<vmem>>, vector<1x16x32xf32>
    %437 = vector.shape_cast %436 : vector<1x16x32xf32> to vector<16x32xf32>
    %c37 = arith.constant 37 : index
    %c0_289 = arith.constant 0 : index
    %c0_290 = arith.constant 0 : index
    %438 = vector.load %arg1[%c37, %c0_289, %c0_290] : memref<49x1x32xf32, #tpu.memory_space<vmem>>, vector<1x1x32xf32>
    %439 = vector.shape_cast %438 : vector<1x1x32xf32> to vector<1x32xf32>
    %440 = vector.broadcast %439 : vector<1x32xf32> to vector<16x32xf32>
    %441 = arith.mulf %440, %437 : vector<16x32xf32>
    %442 = arith.addf %414, %441 : vector<16x32xf32>
    %c3_291 = arith.constant 3 : index
    %c5_292 = arith.constant 5 : index
    %c0_293 = arith.constant 0 : index
    %443 = vector.load %arg4[%c3_291, %c5_292, %c0_293] : memref<7x22x32xf32, #tpu.memory_space<vmem>>, vector<1x16x32xf32>
    %444 = vector.shape_cast %443 : vector<1x16x32xf32> to vector<16x32xf32>
    %c38 = arith.constant 38 : index
    %c0_294 = arith.constant 0 : index
    %c0_295 = arith.constant 0 : index
    %445 = vector.load %arg1[%c38, %c0_294, %c0_295] : memref<49x1x32xf32, #tpu.memory_space<vmem>>, vector<1x1x32xf32>
    %446 = vector.shape_cast %445 : vector<1x1x32xf32> to vector<1x32xf32>
    %447 = vector.broadcast %446 : vector<1x32xf32> to vector<16x32xf32>
    %448 = arith.mulf %447, %444 : vector<16x32xf32>
    %449 = arith.addf %421, %448 : vector<16x32xf32>
    %c4_296 = arith.constant 4 : index
    %c5_297 = arith.constant 5 : index
    %c0_298 = arith.constant 0 : index
    %450 = vector.load %arg4[%c4_296, %c5_297, %c0_298] : memref<7x22x32xf32, #tpu.memory_space<vmem>>, vector<1x16x32xf32>
    %451 = vector.shape_cast %450 : vector<1x16x32xf32> to vector<16x32xf32>
    %c39 = arith.constant 39 : index
    %c0_299 = arith.constant 0 : index
    %c0_300 = arith.constant 0 : index
    %452 = vector.load %arg1[%c39, %c0_299, %c0_300] : memref<49x1x32xf32, #tpu.memory_space<vmem>>, vector<1x1x32xf32>
    %453 = vector.shape_cast %452 : vector<1x1x32xf32> to vector<1x32xf32>
    %454 = vector.broadcast %453 : vector<1x32xf32> to vector<16x32xf32>
    %455 = arith.mulf %454, %451 : vector<16x32xf32>
    %456 = arith.addf %428, %455 : vector<16x32xf32>
    %c5_301 = arith.constant 5 : index
    %c5_302 = arith.constant 5 : index
    %c0_303 = arith.constant 0 : index
    %457 = vector.load %arg4[%c5_301, %c5_302, %c0_303] : memref<7x22x32xf32, #tpu.memory_space<vmem>>, vector<1x16x32xf32>
    %458 = vector.shape_cast %457 : vector<1x16x32xf32> to vector<16x32xf32>
    %c40 = arith.constant 40 : index
    %c0_304 = arith.constant 0 : index
    %c0_305 = arith.constant 0 : index
    %459 = vector.load %arg1[%c40, %c0_304, %c0_305] : memref<49x1x32xf32, #tpu.memory_space<vmem>>, vector<1x1x32xf32>
    %460 = vector.shape_cast %459 : vector<1x1x32xf32> to vector<1x32xf32>
    %461 = vector.broadcast %460 : vector<1x32xf32> to vector<16x32xf32>
    %462 = arith.mulf %461, %458 : vector<16x32xf32>
    %463 = arith.addf %435, %462 : vector<16x32xf32>
    %c6_306 = arith.constant 6 : index
    %c5_307 = arith.constant 5 : index
    %c0_308 = arith.constant 0 : index
    %464 = vector.load %arg4[%c6_306, %c5_307, %c0_308] : memref<7x22x32xf32, #tpu.memory_space<vmem>>, vector<1x16x32xf32>
    %465 = vector.shape_cast %464 : vector<1x16x32xf32> to vector<16x32xf32>
    %c41 = arith.constant 41 : index
    %c0_309 = arith.constant 0 : index
    %c0_310 = arith.constant 0 : index
    %466 = vector.load %arg1[%c41, %c0_309, %c0_310] : memref<49x1x32xf32, #tpu.memory_space<vmem>>, vector<1x1x32xf32>
    %467 = vector.shape_cast %466 : vector<1x1x32xf32> to vector<1x32xf32>
    %468 = vector.broadcast %467 : vector<1x32xf32> to vector<16x32xf32>
    %469 = arith.mulf %468, %465 : vector<16x32xf32>
    %470 = arith.addf %442, %469 : vector<16x32xf32>
    %c0_311 = arith.constant 0 : index
    %c6_312 = arith.constant 6 : index
    %c0_313 = arith.constant 0 : index
    %471 = vector.load %arg4[%c0_311, %c6_312, %c0_313] : memref<7x22x32xf32, #tpu.memory_space<vmem>>, vector<1x16x32xf32>
    %472 = vector.shape_cast %471 : vector<1x16x32xf32> to vector<16x32xf32>
    %c42 = arith.constant 42 : index
    %c0_314 = arith.constant 0 : index
    %c0_315 = arith.constant 0 : index
    %473 = vector.load %arg1[%c42, %c0_314, %c0_315] : memref<49x1x32xf32, #tpu.memory_space<vmem>>, vector<1x1x32xf32>
    %474 = vector.shape_cast %473 : vector<1x1x32xf32> to vector<1x32xf32>
    %475 = vector.broadcast %474 : vector<1x32xf32> to vector<16x32xf32>
    %476 = arith.mulf %475, %472 : vector<16x32xf32>
    %477 = arith.addf %449, %476 : vector<16x32xf32>
    %c1_316 = arith.constant 1 : index
    %c6_317 = arith.constant 6 : index
    %c0_318 = arith.constant 0 : index
    %478 = vector.load %arg4[%c1_316, %c6_317, %c0_318] : memref<7x22x32xf32, #tpu.memory_space<vmem>>, vector<1x16x32xf32>
    %479 = vector.shape_cast %478 : vector<1x16x32xf32> to vector<16x32xf32>
    %c43 = arith.constant 43 : index
    %c0_319 = arith.constant 0 : index
    %c0_320 = arith.constant 0 : index
    %480 = vector.load %arg1[%c43, %c0_319, %c0_320] : memref<49x1x32xf32, #tpu.memory_space<vmem>>, vector<1x1x32xf32>
    %481 = vector.shape_cast %480 : vector<1x1x32xf32> to vector<1x32xf32>
    %482 = vector.broadcast %481 : vector<1x32xf32> to vector<16x32xf32>
    %483 = arith.mulf %482, %479 : vector<16x32xf32>
    %484 = arith.addf %456, %483 : vector<16x32xf32>
    %c2_321 = arith.constant 2 : index
    %c6_322 = arith.constant 6 : index
    %c0_323 = arith.constant 0 : index
    %485 = vector.load %arg4[%c2_321, %c6_322, %c0_323] : memref<7x22x32xf32, #tpu.memory_space<vmem>>, vector<1x16x32xf32>
    %486 = vector.shape_cast %485 : vector<1x16x32xf32> to vector<16x32xf32>
    %c44 = arith.constant 44 : index
    %c0_324 = arith.constant 0 : index
    %c0_325 = arith.constant 0 : index
    %487 = vector.load %arg1[%c44, %c0_324, %c0_325] : memref<49x1x32xf32, #tpu.memory_space<vmem>>, vector<1x1x32xf32>
    %488 = vector.shape_cast %487 : vector<1x1x32xf32> to vector<1x32xf32>
    %489 = vector.broadcast %488 : vector<1x32xf32> to vector<16x32xf32>
    %490 = arith.mulf %489, %486 : vector<16x32xf32>
    %491 = arith.addf %463, %490 : vector<16x32xf32>
    %c3_326 = arith.constant 3 : index
    %c6_327 = arith.constant 6 : index
    %c0_328 = arith.constant 0 : index
    %492 = vector.load %arg4[%c3_326, %c6_327, %c0_328] : memref<7x22x32xf32, #tpu.memory_space<vmem>>, vector<1x16x32xf32>
    %493 = vector.shape_cast %492 : vector<1x16x32xf32> to vector<16x32xf32>
    %c45 = arith.constant 45 : index
    %c0_329 = arith.constant 0 : index
    %c0_330 = arith.constant 0 : index
    %494 = vector.load %arg1[%c45, %c0_329, %c0_330] : memref<49x1x32xf32, #tpu.memory_space<vmem>>, vector<1x1x32xf32>
    %495 = vector.shape_cast %494 : vector<1x1x32xf32> to vector<1x32xf32>
    %496 = vector.broadcast %495 : vector<1x32xf32> to vector<16x32xf32>
    %497 = arith.mulf %496, %493 : vector<16x32xf32>
    %498 = arith.addf %470, %497 : vector<16x32xf32>
    %c4_331 = arith.constant 4 : index
    %c6_332 = arith.constant 6 : index
    %c0_333 = arith.constant 0 : index
    %499 = vector.load %arg4[%c4_331, %c6_332, %c0_333] : memref<7x22x32xf32, #tpu.memory_space<vmem>>, vector<1x16x32xf32>
    %500 = vector.shape_cast %499 : vector<1x16x32xf32> to vector<16x32xf32>
    %c46 = arith.constant 46 : index
    %c0_334 = arith.constant 0 : index
    %c0_335 = arith.constant 0 : index
    %501 = vector.load %arg1[%c46, %c0_334, %c0_335] : memref<49x1x32xf32, #tpu.memory_space<vmem>>, vector<1x1x32xf32>
    %502 = vector.shape_cast %501 : vector<1x1x32xf32> to vector<1x32xf32>
    %503 = vector.broadcast %502 : vector<1x32xf32> to vector<16x32xf32>
    %504 = arith.mulf %503, %500 : vector<16x32xf32>
    %505 = arith.addf %477, %504 : vector<16x32xf32>
    %c5_336 = arith.constant 5 : index
    %c6_337 = arith.constant 6 : index
    %c0_338 = arith.constant 0 : index
    %506 = vector.load %arg4[%c5_336, %c6_337, %c0_338] : memref<7x22x32xf32, #tpu.memory_space<vmem>>, vector<1x16x32xf32>
    %507 = vector.shape_cast %506 : vector<1x16x32xf32> to vector<16x32xf32>
    %c47 = arith.constant 47 : index
    %c0_339 = arith.constant 0 : index
    %c0_340 = arith.constant 0 : index
    %508 = vector.load %arg1[%c47, %c0_339, %c0_340] : memref<49x1x32xf32, #tpu.memory_space<vmem>>, vector<1x1x32xf32>
    %509 = vector.shape_cast %508 : vector<1x1x32xf32> to vector<1x32xf32>
    %510 = vector.broadcast %509 : vector<1x32xf32> to vector<16x32xf32>
    %511 = arith.mulf %510, %507 : vector<16x32xf32>
    %512 = arith.addf %484, %511 : vector<16x32xf32>
    %c6_341 = arith.constant 6 : index
    %c6_342 = arith.constant 6 : index
    %c0_343 = arith.constant 0 : index
    %513 = vector.load %arg4[%c6_341, %c6_342, %c0_343] : memref<7x22x32xf32, #tpu.memory_space<vmem>>, vector<1x16x32xf32>
    %514 = vector.shape_cast %513 : vector<1x16x32xf32> to vector<16x32xf32>
    %c48 = arith.constant 48 : index
    %c0_344 = arith.constant 0 : index
    %c0_345 = arith.constant 0 : index
    %515 = vector.load %arg1[%c48, %c0_344, %c0_345] : memref<49x1x32xf32, #tpu.memory_space<vmem>>, vector<1x1x32xf32>
    %516 = vector.shape_cast %515 : vector<1x1x32xf32> to vector<1x32xf32>
    %517 = vector.broadcast %516 : vector<1x32xf32> to vector<16x32xf32>
    %518 = arith.mulf %517, %514 : vector<16x32xf32>
    %519 = arith.addf %491, %518 : vector<16x32xf32>
    %520 = arith.addf %519, %498 : vector<16x32xf32>
    %521 = arith.addf %505, %512 : vector<16x32xf32>
    %522 = arith.addf %520, %521 : vector<16x32xf32>
    %523 = vector.extract_strided_slice %522 {offsets = [0, 0], sizes = [16, 16], strides = [1, 1]} : vector<16x32xf32> to vector<16x16xf32>
    %524 = vector.extract_strided_slice %522 {offsets = [0, 16], sizes = [16, 16], strides = [1, 1]} : vector<16x32xf32> to vector<16x16xf32>
    %525 = arith.addf %523, %524 : vector<16x16xf32>
    %526 = arith.negf %525 : vector<16x16xf32>
    %527 = math.exp %526 : vector<16x16xf32>
    %cst_346 = arith.constant 1.000000e+00 : f32
    %528 = vector.broadcast %cst_346 : f32 to vector<16x16xf32>
    %529 = arith.addf %528, %527 : vector<16x16xf32>
    %530 = arith.divf %528, %529 : vector<16x16xf32>
    %c0_347 = arith.constant 0 : index
    %c0_348 = arith.constant 0 : index
    %c0_349 = arith.constant 0 : index
    %531 = vector.load %arg3[%c0_347, %c0_348, %c0_349] : memref<1x16x16xf32, #tpu.memory_space<vmem>>, vector<1x16x16xf32>
    %532 = vector.shape_cast %531 : vector<1x16x16xf32> to vector<16x16xf32>
    %533 = vector.shape_cast %530 : vector<16x16xf32> to vector<1x16x16xf32>
    tpu.vector_store %arg3[%c0_347, %c0_348, %c0_349], %533 {strides = array<i32>} : memref<1x16x16xf32, #tpu.memory_space<vmem>>, vector<1x16x16xf32>,
    return
  }
  func.func @transform_0(%arg0: i32) -> (i32, i32, i32) {
    %c0_i32 = arith.constant 0 : i32
    %c0_i32_0 = arith.constant 0 : i32
    %c0_i32_1 = arith.constant 0 : i32
    %c0_i32_2 = arith.constant 0 : i32
    return %c0_i32, %c0_i32_0, %c0_i32_1 : i32, i32, i32
  }
  func.func @transform_1(%arg0: i32) -> (i32, i32, i32, i32) {
    %c0_i32 = arith.constant 0 : i32
    %c0_i32_0 = arith.constant 0 : i32
    %c0_i32_1 = arith.constant 0 : i32
    %c0_i32_2 = arith.constant 0 : i32
    return %arg0, %c0_i32, %c0_i32_0, %c0_i32_1 : i32, i32, i32, i32
  }
  func.func @transform_2(%arg0: i32) -> (i32, i32, i32) {
    %c0_i32 = arith.constant 0 : i32
    %c0_i32_0 = arith.constant 0 : i32
    %c0_i32_1 = arith.constant 0 : i32
    return %arg0, %c0_i32, %c0_i32_0 : i32, i32, i32
  }
}

</mosaic_0001>

<llo_original>
// kernel: tpu_custom_call.1
$region0: #{tpu_custom_call.1}
  #allocation0 [shape = 'u32[]', space=smem, size = 0x4, offset = 0x4, fixed_abs, tag = 'smem constant byte address 0x4 - core index']
  #allocation1 [shape = 'u32[144,128]{1,0:T(1,128)}', space=vmem, size = 0x12000, scoped, tag = 'internal scratch']
  #allocation2 [shape = 'f32[7,22,32]{2,1,0:T(8,128)}', space=vmem, size = 0x15000, scoped, tag = 'scratch operand']
  %s0 = inlined_call_operand.vmem [shape: f32[49,1,32], index: 0, kind: input, shape index: {}]
  %s1 = inlined_call_operand.hbm [shape: f32[2,4,16,16], index: 1, kind: input, shape index: {}]
  %s2 = inlined_call_operand.hbm [shape: f32[2,16,16], index: 2, kind: output, shape index: {}]
  %s3 = sld [smem:[#allocation0]]
  $region45: #{tpu_custom_call.1} parent=0
    _
  %s5 = ssub.s32 1, %s3
  %s6 = scalar_select 0, %s5, %s3
  $region1: #{tpu_custom_call.1} parent=0
    #allocation3 [shape = 'u8[65536]{0}', space=vmem, size = 0x10000, scoped, tag = 'input window, operand 1']
    #allocation4 [shape = 's32[2]{0}', space=sflag, size = 0x8, scoped, tag = 'scoped memory for tpu_custom_call.1']
    #allocation5 [shape = 's32[2]{0}', space=sflag, size = 0x8, scoped, tag = 'scoped memory for tpu_custom_call.1']
    #allocation6 [shape = 'u8[16384]{0}', space=vmem, size = 0x4000, scoped, tag = 'output window, operand 0']
    %7 = vsyncpa [#allocation4], 0
    %s8 = scalar_lea.sflag [#allocation4], 1
    %9 = vsyncpa %s8, 0
    %10 = vsyncpa [#allocation5], 0
    %s11 = scalar_lea.sflag [#allocation5], 1
    %12 = vsyncpa %s11, 0
    loop: start=0, step=1, limit=4
    $region2: #{tpu_custom_call.1} parent=1 // loop_pre_header
      _
    $region3: #{tpu_custom_call.1} parent=1 // loop_header
      %s14 = sphi 0, %s18
      %p15 = scmp.ge.s32.totalorder %s14, 4
      %s22 = sphi 0, %s22
      %s24 = sphi 0, %s22
      %s25 = sphi 0, %s24
      %s39 = sphi 0, %s25
      %s45 = sphi 0, %s47
      %s48 = sphi 0, %s45
      %s49 = sphi 0, %s48
      %s65 = sphi 0, %s49
      %s71 = sphi 0, %s73
      %s74 = sphi 0, %s71
      %s75 = sphi 0, %s74
      %s91 = sphi 0, %s75
    $region4: #{tpu_custom_call.1} parent=1 // loop_header_branch
      %17 = sbr.rel (%p15) target = $region8
    $region5: #{tpu_custom_call.1} parent=1 // loop_body
      %s19 = ssub.s32 %s14, 1
      %s20 = ssub.s32 %s14, 2
      %s21 = sadd.s32 %s14, 1
      %s23 = sadd.s32 %s22, 1
      %p26 = scmp.eq.s32.totalorder %s14, 1
      %p27 = scmp.ne.s32.totalorder %s22, %s24
      %p28 = scmp.eq.s32.totalorder %s14, 0
      %p29 = por %p27, %p28
      %p30 = scmp.ne.s32.totalorder %s22, %s24
      %p31 = scmp.eq.s32.totalorder %s19, 1
      %p32 = por %p30, %p31
      %p33 = scmp.ne.s32.totalorder %s24, %s25
      %p34 = scmp.eq.s32.totalorder %s19, 0
      %p35 = por %p33, %p34
      %p36 = scmp.ne.s32.totalorder %s24, %s25
      %p37 = scmp.eq.s32.totalorder %s20, 1
      %p38 = por %p36, %p37
      %p40 = scmp.ne.s32.totalorder %s25, %s39
      %p41 = scmp.eq.s32.totalorder %s20, 0
      %p42 = por %p40, %p41
      %s43 = ssub.s32 %s14, %s21
      %p44 = scmp.eq.s32.totalorder %s43, 0
      %s46 = sadd.s32 %s45, 1
      %s47 = scalar_select %p44, %s45, %s46
      %p50 = pneg %p44
      %p51 = scmp.eq.s32.totalorder %s14, 1
      %p52 = por %p50, %p51
      %p53 = scmp.ne.s32.totalorder %s45, %s48
      %p54 = scmp.eq.s32.totalorder %s14, 0
      %p55 = por %p53, %p54
      %p56 = scmp.ne.s32.totalorder %s45, %s48
      %p57 = scmp.eq.s32.totalorder %s19, 1
      %p58 = por %p56, %p57
      %p59 = scmp.ne.s32.totalorder %s48, %s49
      %p60 = scmp.eq.s32.totalorder %s19, 0
      %p61 = por %p59, %p60
      %p62 = scmp.ne.s32.totalorder %s48, %s49
      %p63 = scmp.eq.s32.totalorder %s20, 1
      %p64 = por %p62, %p63
      %p66 = scmp.ne.s32.totalorder %s49, %s65
      %p67 = scmp.eq.s32.totalorder %s20, 0
      %p68 = por %p66, %p67
      %s69 = ssub.s32 %s14, %s21
      %p70 = scmp.eq.s32.totalorder %s69, 0
      %s72 = sadd.s32 %s71, 1
      %s73 = scalar_select %p70, %s71, %s72
      %p76 = pneg %p70
      %p77 = scmp.eq.s32.totalorder %s14, 1
      %p78 = por %p76, %p77
      %p79 = scmp.ne.s32.totalorder %s71, %s74
      %p80 = scmp.eq.s32.totalorder %s14, 0
      %p81 = por %p79, %p80
      %p82 = scmp.ne.s32.totalorder %s71, %s74
      %p83 = scmp.eq.s32.totalorder %s19, 1
      %p84 = por %p82, %p83
      %p85 = scmp.ne.s32.totalorder %s74, %s75
      %p86 = scmp.eq.s32.totalorder %s19, 0
      %p87 = por %p85, %p86
      %p88 = scmp.ne.s32.totalorder %s74, %s75
      %p89 = scmp.eq.s32.totalorder %s20, 1
      %p90 = por %p88, %p89
      %p92 = scmp.ne.s32.totalorder %s75, %s91
      %p93 = scmp.eq.s32.totalorder %s20, 0
      %p94 = por %p92, %p93
      %p95 = scmp.le.s32.totalorder 1, %s14
      %p96 = scmp.lt.s32.totalorder %s14, 3
      %p97 = pnand %p95, %p96
      %p98 = pneg %p97
      // Predicated region
      $region9: #{tpu_custom_call.1} parent=5 // pred_check
        _
      $region10: #{tpu_custom_call.1} parent=5 // pred_check_branch
        %100 = sbr.rel (%p97) target = $region12
      $region11: #{tpu_custom_call.1} parent=5 // pred_region
        %s101 = ssub.s32 %s14, 1
        // Predicated region
        $region13: #{tpu_custom_call.1} parent=11 // pred_check
          %p102 = pneg %p35
        $region14: #{tpu_custom_call.1} parent=11 // pred_check_branch
          %104 = sbr.rel (%p102) target = $region16
        $region15: #{tpu_custom_call.1} parent=11 // pred_region
          _
        $region16: #{tpu_custom_call.1} parent=11 // pred_fallthru
          _
      $region12: #{tpu_custom_call.1} parent=5 // pred_fallthru
        _
      %p105 = scmp.lt.s32.totalorder %s14, 2
      // Predicated region
      $region17: #{tpu_custom_call.1} parent=5 // pred_check
        %p106 = pneg %p105
      $region18: #{tpu_custom_call.1} parent=5 // pred_check_branch
        %108 = sbr.rel (%p106) target = $region20
      $region19: #{tpu_custom_call.1} parent=5 // pred_region
        // Predicated region
        $region21: #{tpu_custom_call.1} parent=19 // pred_check
          %p109 = pneg %p55
        $region22: #{tpu_custom_call.1} parent=19 // pred_check_branch
          %111 = sbr.rel (%p109) target = $region24
        $region23: #{tpu_custom_call.1} parent=19 // pred_region
          %s112 = sand.u32 %s45, 1
          %s113 = scalar_lea.sflag [#allocation4], %s112
          %s114 = sand.u32 %s45, 1
          %s115 = smul.addr %s114, 64
          %s116 = scalar_lea.vmem [#allocation3], %s115
          %s118 = ssub.s32 1024, 1024
          %119 = vsyncadd %s113, %s118
          %s120 = smul.addr %s14, 8
          %s121 = smul.addr %s120, 128
          %s122 = scalar_lea.hbm %s1, %s121
          %s123 = sshll.u32 %s116, 4
          %s124 = int_to_ptr.vmem [resolvable:$true] %s123
          %129 = dma.hbm_to_vmem [thread:$0]  %s122, 1024, %s124, %s113, 128, 128, 8
        $region24: #{tpu_custom_call.1} parent=19 // pred_fallthru
          _
      $region20: #{tpu_custom_call.1} parent=5 // pred_fallthru
        _
      %p130 = scmp.le.s32.totalorder 1, %s14
      %p131 = scmp.lt.s32.totalorder %s14, 3
      %p132 = pnand %p130, %p131
      %p133 = pneg %p132
      // Predicated region
      $region25: #{tpu_custom_call.1} parent=5 // pred_check
        _
      $region26: #{tpu_custom_call.1} parent=5 // pred_check_branch
        %135 = sbr.rel (%p132) target = $region28
      $region27: #{tpu_custom_call.1} parent=5 // pred_region
        %s136 = ssub.s32 %s14, 1
        %s137 = sand.u32 %s48, 1
        %s138 = scalar_lea.sflag [#allocation4], %s137
        %s139 = sand.u32 %s48, 1
        %s140 = smul.addr %s139, 64
        %s141 = scalar_lea.vmem [#allocation3], %s140
        // Predicated region
        $region29: #{tpu_custom_call.1} parent=27 // pred_check
          %p142 = pneg %p61
        $region30: #{tpu_custom_call.1} parent=27 // pred_check_branch
          %144 = sbr.rel (%p142) target = $region32
        $region31: #{tpu_custom_call.1} parent=27 // pred_region
          %145 = dma.done %s138, 1024
        $region32: #{tpu_custom_call.1} parent=27 // pred_fallthru
          _
        %p146 = pneg %p35
        %p147 = pneg %p32
        %s148 = sand.u32 %s48, 1
        %s149 = scalar_lea.sflag [#allocation4], %s148
        %s150 = sand.u32 %s48, 1
        %s151 = smul.addr %s150, 64
        %s152 = scalar_lea.vmem [#allocation3], %s151
        %p153 = pneg %p61
        %p154 = pneg %p58
        %p155 = pneg %p87
        %p156 = pneg %p84
        %s157 = sand.u32 %s74, 1
        %s158 = scalar_lea.sflag [#allocation5], %s157
        %s159 = sand.u32 %s74, 1
        %s160 = smul.addr %s159, 16
        %s161 = scalar_lea.vmem [#allocation6], %s160
        %v162 = vld [vmem:[%s141] sm:$0xff]
        %v163 = vld [vmem:[%s141 + $0x8] sm:$0xff]
        %v164 = vld [vmem:[%s141 + $0x10] sm:$0xff]
        %v165 = vld [vmem:[%s141 + $0x18] sm:$0xff]
        %v166 = vld [vmem:[%s141 + $0x20] sm:$0xff]
        %v167 = vld [vmem:[%s141 + $0x28] sm:$0xff]
        %v168 = vld [vmem:[%s141 + $0x30] sm:$0xff]
        %v169 = vld [vmem:[%s141 + $0x38] sm:$0xff]
        %vm170 = vcmask 130048
        %v171 = vsel %vm170, %v162, 0.0
        %v172 = vsel %vm170, %v164, 0.0
        %v173 = vadd.f32 %v171, %v172
        %v174 = vsel %vm170, %v166, 0.0
        %v175 = vadd.f32 %v173, %v174
        %v176 = vsel %vm170, %v168, 0.0
        %v177 = vadd.f32 %v175, %v176
        %v178 = vsel %vm170, %v163, 0.0
        %v179 = vsel %vm170, %v165, 0.0
        %v180 = vadd.f32 %v178, %v179
        %v181 = vsel %vm170, %v167, 0.0
        %v182 = vadd.f32 %v180, %v181
        %v183 = vsel %vm170, %v169, 0.0
        %v184 = vadd.f32 %v182, %v183
        %v185 = vrcp.pop 4.0
        %v186 = vmul.f32 %v177, %v185
        %v187 = vmul.f32 %v184, %v185
        %v188 = vsel %vm170, %v162, -inf
        %v189 = vsel %vm170, %v164, -inf
        %v190 = vsel %vm170, %v166, -inf
        %v191 = vmax.f32 %v188, %v190
        %v192 = vsel %vm170, %v168, -inf
        %v193 = vmax.f32 %v189, %v192
        %v194 = vmax.f32 %v191, %v193
        %v195 = vsel %vm170, %v163, -inf
        %v196 = vsel %vm170, %v165, -inf
        %v197 = vsel %vm170, %v167, -inf
        %v198 = vmax.f32 %v195, %v197
        %v199 = vsel %vm170, %v169, -inf
        %v200 = vmax.f32 %v196, %v199
        %v201 = vmax.f32 %v198, %v200
        %204 = vrot.lane.b32.xlu0 %v186, 3
        %v205 = vpop.permute.xlu0 %204
        %206 = vrot.lane.b32.xlu0 %v187, 3
        %v207 = vpop.permute.xlu0 %206
        %212 = vrot.lane.b32.xlu0 %v194, 19
        %v213 = vpop.permute.xlu0 %212
        %214 = vrot.lane.b32.xlu0 %v201, 19
        %v215 = vpop.permute.xlu0 %214
        %vm218 = vcmask 23552
        %v219 = vsel %vm218, 0.0, %v205
        %v220 = vsel %vm218, 0.0, %v207
        %vm221 = vcmask 154624
        %v222 = vsel %vm221, %v219, %v213
        %v223 = vsel %vm221, %v220, %v215
        %vm224 = vcmask 285696
        %v225 = vsel %vm224, %v222, 0.0
        %v226 = vsel %vm224, %v223, 0.0
        %v227 = vlaneseq
        %v228 = vand.u32 %v227, 127
        %vm229 = vcmp.lt.s32.totalorder %v228, 0
        %v230 = vsub.s32 0, %v228
        %v231 = vsel %vm229, %v230, %v228
        %v232 = vshrl.u32 %v231, 4
        %v233 = vand.u32 %v231, 15
        %v234 = vsub.s32 0, %v233
        %v235 = vsel %vm229, %v234, %v233
        %vm236 = vcmp.ne.s32.totalorder %v235, 0
        %vm237 = vcmp.lt.s32.totalorder %v235, 0
        %vm238 = vmand %vm237, %vm236
        %v239 = vadd.s32 %v235, 16
        %v240 = vsel %vm238, %v239, %v235
        %v241 = vadd.s32 %v240, 4294967293
        %vm242 = vcmp.ge.s32.totalorder %v241, 0
        %vm243 = vcmp.lt.s32.totalorder %v241, 16
        %vm244 = vmand %vm242, %vm243
        %v245 = vsel %vm244, 1, 0
        %vm246 = vcmp.eq.s32.totalorder %v245, 1
        %v247 = vsel %vm246, %v225, 0.0
        %v248 = vsel %vm246, %v226, 0.0
        %vm249 = vcmask 256000
        %250 = vst.msk [vmem:[#allocation2] sm:$0x7] %vm249, 0.0
        %vm251 = vcmask 261120
        %252 = vst.msk [vmem:[#allocation2 + $0x3] sm:$0xff] %vm251, %v247
        %253 = vst.msk [vmem:[#allocation2 + $0xb] sm:$0xff] %vm251, %v248
        %254 = vst.msk [vmem:[#allocation2 + $0x13] sm:$0x7] %vm249, 0.0
        %v255 = vadd.s32 %v240, 4294967294
        %vm256 = vcmp.ge.s32.totalorder %v255, 0
        %vm257 = vcmp.lt.s32.totalorder %v255, 16
        %vm258 = vmand %vm256, %vm257
        %v259 = vsel %vm258, 1, 0
        %vm260 = vcmp.eq.s32.totalorder %v259, 1
        %263 = vrot.lane.b32.xlu0 %v225, 127
        %v264 = vpop.permute.xlu0 %263
        %265 = vrot.lane.b32.xlu0 %v226, 127
        %v266 = vpop.permute.xlu0 %265
        %v269 = vsel %vm260, %v264, 0.0
        %v270 = vsel %vm260, %v266, 0.0
        %s271 = scalar_lea.vmem [#allocation2], 24
        %272 = vst.msk [vmem:[%s271] sm:$0x7] %vm249, 0.0
        %273 = vst.msk [vmem:[%s271 + $0x3] sm:$0xff] %vm251, %v269
        %274 = vst.msk [vmem:[%s271 + $0xb] sm:$0xff] %vm251, %v270
        %275 = vst.msk [vmem:[%s271 + $0x13] sm:$0x7] %vm249, 0.0
        %v276 = vadd.s32 %v240, 4294967295
        %vm277 = vcmp.ge.s32.totalorder %v276, 0
        %vm278 = vcmp.lt.s32.totalorder %v276, 16
        %vm279 = vmand %vm277, %vm278
        %v280 = vsel %vm279, 1, 0
        %vm281 = vcmp.eq.s32.totalorder %v280, 1
        %282 = vrot.lane.b32.xlu0 %v225, 126
        %v283 = vpop.permute.xlu0 %282
        %284 = vrot.lane.b32.xlu0 %v226, 126
        %v285 = vpop.permute.xlu0 %284
        %v288 = vsel %vm281, %v283, 0.0
        %v289 = vsel %vm281, %v285, 0.0
        %s290 = scalar_lea.vmem [#allocation2], 48
        %291 = vst.msk [vmem:[%s290] sm:$0x7] %vm249, 0.0
        %292 = vst.msk [vmem:[%s290 + $0x3] sm:$0xff] %vm251, %v288
        %293 = vst.msk [vmem:[%s290 + $0xb] sm:$0xff] %vm251, %v289
        %294 = vst.msk [vmem:[%s290 + $0x13] sm:$0x7] %vm249, 0.0
        %vm295 = vcmp.ge.s32.totalorder %v240, 0
        %vm296 = vcmp.lt.s32.totalorder %v240, 16
        %vm297 = vmand %vm295, %vm296
        %v298 = vsel %vm297, 1, 0
        %vm299 = vcmp.eq.s32.totalorder %v298, 1
        %300 = vrot.lane.b32.xlu0 %v225, 125
        %v301 = vpop.permute.xlu0 %300
        %302 = vrot.lane.b32.xlu0 %v226, 125
        %v303 = vpop.permute.xlu0 %302
        %v306 = vsel %vm299, %v301, 0.0
        %v307 = vsel %vm299, %v303, 0.0
        %s308 = scalar_lea.vmem [#allocation2], 72
        %309 = vst.msk [vmem:[%s308] sm:$0x7] %vm249, 0.0
        %310 = vst.msk [vmem:[%s308 + $0x3] sm:$0xff] %vm251, %v306
        %311 = vst.msk [vmem:[%s308 + $0xb] sm:$0xff] %vm251, %v307
        %312 = vst.msk [vmem:[%s308 + $0x13] sm:$0x7] %vm249, 0.0
        %v313 = vadd.s32 %v240, 1
        %vm314 = vcmp.ge.s32.totalorder %v313, 0
        %vm315 = vcmp.lt.s32.totalorder %v313, 16
        %vm316 = vmand %vm314, %vm315
        %v317 = vsel %vm316, 1, 0
        %vm318 = vcmp.eq.s32.totalorder %v317, 1
        %319 = vrot.lane.b32.xlu0 %v225, 124
        %v320 = vpop.permute.xlu0 %319
        %321 = vrot.lane.b32.xlu0 %v226, 124
        %v322 = vpop.permute.xlu0 %321
        %v325 = vsel %vm318, %v320, 0.0
        %v326 = vsel %vm318, %v322, 0.0
        %s327 = scalar_lea.vmem [#allocation2], 96
        %328 = vst.msk [vmem:[%s327] sm:$0x7] %vm249, 0.0
        %329 = vst.msk [vmem:[%s327 + $0x3] sm:$0xff] %vm251, %v325
        %330 = vst.msk [vmem:[%s327 + $0xb] sm:$0xff] %vm251, %v326
        %331 = vst.msk [vmem:[%s327 + $0x13] sm:$0x7] %vm249, 0.0
        %v332 = vadd.s32 %v240, 2
        %vm333 = vcmp.ge.s32.totalorder %v332, 0
        %vm334 = vcmp.lt.s32.totalorder %v332, 16
        %vm335 = vmand %vm333, %vm334
        %v336 = vsel %vm335, 1, 0
        %vm337 = vcmp.eq.s32.totalorder %v336, 1
        %338 = vrot.lane.b32.xlu0 %v225, 123
        %v339 = vpop.permute.xlu0 %338
        %340 = vrot.lane.b32.xlu0 %v226, 123
        %v341 = vpop.permute.xlu0 %340
        %v344 = vsel %vm337, %v339, 0.0
        %v345 = vsel %vm337, %v341, 0.0
        %s346 = scalar_lea.vmem [#allocation2], 120
        %347 = vst.msk [vmem:[%s346] sm:$0x7] %vm249, 0.0
        %348 = vst.msk [vmem:[%s346 + $0x3] sm:$0xff] %vm251, %v344
        %349 = vst.msk [vmem:[%s346 + $0xb] sm:$0xff] %vm251, %v345
        %350 = vst.msk [vmem:[%s346 + $0x13] sm:$0x7] %vm249, 0.0
        %v351 = vadd.s32 %v240, 3
        %vm352 = vcmp.ge.s32.totalorder %v351, 0
        %vm353 = vcmp.lt.s32.totalorder %v351, 16
        %vm354 = vmand %vm352, %vm353
        %v355 = vsel %vm354, 1, 0
        %vm356 = vcmp.eq.s32.totalorder %v355, 1
        %357 = vrot.lane.b32.xlu0 %v225, 122
        %v358 = vpop.permute.xlu0 %357
        %359 = vrot.lane.b32.xlu0 %v226, 122
        %v360 = vpop.permute.xlu0 %359
        %v363 = vsel %vm356, %v358, 0.0
        %v364 = vsel %vm356, %v360, 0.0
        %s365 = scalar_lea.vmem [#allocation2], 144
        %366 = vst.msk [vmem:[%s365] sm:$0x7] %vm249, 0.0
        %367 = vst.msk [vmem:[%s365 + $0x3] sm:$0xff] %vm251, %v363
        %368 = vst.msk [vmem:[%s365 + $0xb] sm:$0xff] %vm251, %v364
        %369 = vst.msk [vmem:[%s365 + $0x13] sm:$0x7] %vm249, 0.0
        %v370 = vld [vmem:[#allocation2] sm:$0xff]
        %v371 = vld [vmem:[#allocation2 + $0x8] sm:$0xff]
        %v372 = vld [vmem:[%s0] sm:$0x1]
        %v374 = vlaneseq
        %v375 = vshrl.u32 %v374, 7
        %v376 = vsub.s32 0, %v375
        %v377 = vrot.slane %v372, %v376
        %v379 = vmul.f32 %v377, %v370
        %v380 = vmul.f32 %v377, %v371
        %v381 = vadd.f32 %v379, 0.0
        %v382 = vadd.f32 %v380, 0.0
        %v383 = vld [vmem:[%s271] sm:$0xff]
        %v384 = vld [vmem:[%s271 + $0x8] sm:$0xff]
        %s385 = scalar_lea.vmem %s0, 1
        %v386 = vld [vmem:[%s385] sm:$0x1]
        %v388 = vlaneseq
        %v389 = vshrl.u32 %v388, 7
        %v390 = vsub.s32 0, %v389
        %v391 = vrot.slane %v386, %v390
        %v393 = vmul.f32 %v391, %v383
        %v394 = vmul.f32 %v391, %v384
        %v395 = vadd.f32 %v393, 0.0
        %v396 = vadd.f32 %v394, 0.0
        %v397 = vld [vmem:[%s290] sm:$0xff]
        %v398 = vld [vmem:[%s290 + $0x8] sm:$0xff]
        %s399 = scalar_lea.vmem %s0, 2
        %v400 = vld [vmem:[%s399] sm:$0x1]
        %v402 = vlaneseq
        %v403 = vshrl.u32 %v402, 7
        %v404 = vsub.s32 0, %v403
        %v405 = vrot.slane %v400, %v404
        %v407 = vmul.f32 %v405, %v397
        %v408 = vmul.f32 %v405, %v398
        %v409 = vadd.f32 %v407, 0.0
        %v410 = vadd.f32 %v408, 0.0
        %v411 = vld [vmem:[%s308] sm:$0xff]
        %v412 = vld [vmem:[%s308 + $0x8] sm:$0xff]
        %s413 = scalar_lea.vmem %s0, 3
        %v414 = vld [vmem:[%s413] sm:$0x1]
        %v416 = vlaneseq
        %v417 = vshrl.u32 %v416, 7
        %v418 = vsub.s32 0, %v417
        %v419 = vrot.slane %v414, %v418
        %v421 = vmul.f32 %v419, %v411
        %v422 = vmul.f32 %v419, %v412
        %v423 = vadd.f32 %v421, 0.0
        %v424 = vadd.f32 %v422, 0.0
        %v425 = vld [vmem:[%s327] sm:$0xff]
        %v426 = vld [vmem:[%s327 + $0x8] sm:$0xff]
        %s427 = scalar_lea.vmem %s0, 4
        %v428 = vld [vmem:[%s427] sm:$0x1]
        %v430 = vlaneseq
        %v431 = vshrl.u32 %v430, 7
        %v432 = vsub.s32 0, %v431
        %v433 = vrot.slane %v428, %v432
        %v435 = vmul.f32 %v433, %v425
        %v436 = vmul.f32 %v433, %v426
        %v437 = vadd.f32 %v381, %v435
        %v438 = vadd.f32 %v382, %v436
        %v439 = vld [vmem:[%s346] sm:$0xff]
        %v440 = vld [vmem:[%s346 + $0x8] sm:$0xff]
        %s441 = scalar_lea.vmem %s0, 5
        %v442 = vld [vmem:[%s441] sm:$0x1]
        %v444 = vlaneseq
        %v445 = vshrl.u32 %v444, 7
        %v446 = vsub.s32 0, %v445
        %v447 = vrot.slane %v442, %v446
        %v449 = vmul.f32 %v447, %v439
        %v450 = vmul.f32 %v447, %v440
        %v451 = vadd.f32 %v395, %v449
        %v452 = vadd.f32 %v396, %v450
        %v453 = vld [vmem:[%s365] sm:$0xff]
        %v454 = vld [vmem:[%s365 + $0x8] sm:$0xff]
        %s455 = scalar_lea.vmem %s0, 6
        %v456 = vld [vmem:[%s455] sm:$0x1]
        %v458 = vlaneseq
        %v459 = vshrl.u32 %v458, 7
        %v460 = vsub.s32 0, %v459
        %v461 = vrot.slane %v456, %v460
        %v463 = vmul.f32 %v461, %v453
        %v464 = vmul.f32 %v461, %v454
        %v465 = vadd.f32 %v409, %v463
        %v466 = vadd.f32 %v410, %v464
        %v467 = vld [vmem:[#allocation2 + $0x1] sm:$0xff]
        %v468 = vld [vmem:[#allocation2 + $0x9] sm:$0xff]
        %s469 = scalar_lea.vmem %s0, 7
        %v470 = vld [vmem:[%s469] sm:$0x1]
        %v472 = vlaneseq
        %v473 = vshrl.u32 %v472, 7
        %v474 = vsub.s32 0, %v473
        %v475 = vrot.slane %v470, %v474
        %v477 = vmul.f32 %v475, %v467
        %v478 = vmul.f32 %v475, %v468
        %v479 = vadd.f32 %v423, %v477
        %v480 = vadd.f32 %v424, %v478
        %v481 = vld [vmem:[%s271 + $0x1] sm:$0xff]
        %v482 = vld [vmem:[%s271 + $0x9] sm:$0xff]
        %s483 = scalar_lea.vmem %s0, 8
        %v484 = vld [vmem:[%s483] sm:$0x1]
        %v486 = vlaneseq
        %v487 = vshrl.u32 %v486, 7
        %v488 = vsub.s32 0, %v487
        %v489 = vrot.slane %v484, %v488
        %v491 = vmul.f32 %v489, %v481
        %v492 = vmul.f32 %v489, %v482
        %v493 = vadd.f32 %v437, %v491
        %v494 = vadd.f32 %v438, %v492
        %v495 = vld [vmem:[%s290 + $0x1] sm:$0xff]
        %v496 = vld [vmem:[%s290 + $0x9] sm:$0xff]
        %s497 = scalar_lea.vmem %s0, 9
        %v498 = vld [vmem:[%s497] sm:$0x1]
        %v500 = vlaneseq
        %v501 = vshrl.u32 %v500, 7
        %v502 = vsub.s32 0, %v501
        %v503 = vrot.slane %v498, %v502
        %v505 = vmul.f32 %v503, %v495
        %v506 = vmul.f32 %v503, %v496
        %v507 = vadd.f32 %v451, %v505
        %v508 = vadd.f32 %v452, %v506
        %v509 = vld [vmem:[%s308 + $0x1] sm:$0xff]
        %v510 = vld [vmem:[%s308 + $0x9] sm:$0xff]
        %s511 = scalar_lea.vmem %s0, 10
        %v512 = vld [vmem:[%s511] sm:$0x1]
        %v514 = vlaneseq
        %v515 = vshrl.u32 %v514, 7
        %v516 = vsub.s32 0, %v515
        %v517 = vrot.slane %v512, %v516
        %v519 = vmul.f32 %v517, %v509
        %v520 = vmul.f32 %v517, %v510
        %v521 = vadd.f32 %v465, %v519
        %v522 = vadd.f32 %v466, %v520
        %v523 = vld [vmem:[%s327 + $0x1] sm:$0xff]
        %v524 = vld [vmem:[%s327 + $0x9] sm:$0xff]
        %s525 = scalar_lea.vmem %s0, 11
        %v526 = vld [vmem:[%s525] sm:$0x1]
        %v528 = vlaneseq
        %v529 = vshrl.u32 %v528, 7
        %v530 = vsub.s32 0, %v529
        %v531 = vrot.slane %v526, %v530
        %v533 = vmul.f32 %v531, %v523
        %v534 = vmul.f32 %v531, %v524
        %v535 = vadd.f32 %v479, %v533
        %v536 = vadd.f32 %v480, %v534
        %v537 = vld [vmem:[%s346 + $0x1] sm:$0xff]
        %v538 = vld [vmem:[%s346 + $0x9] sm:$0xff]
        %s539 = scalar_lea.vmem %s0, 12
        %v540 = vld [vmem:[%s539] sm:$0x1]
        %v542 = vlaneseq
        %v543 = vshrl.u32 %v542, 7
        %v544 = vsub.s32 0, %v543
        %v545 = vrot.slane %v540, %v544
        %v547 = vmul.f32 %v545, %v537
        %v548 = vmul.f32 %v545, %v538
        %v549 = vadd.f32 %v493, %v547
        %v550 = vadd.f32 %v494, %v548
        %v551 = vld [vmem:[%s365 + $0x1] sm:$0xff]
        %v552 = vld [vmem:[%s365 + $0x9] sm:$0xff]
        %s553 = scalar_lea.vmem %s0, 13
        %v554 = vld [vmem:[%s553] sm:$0x1]
        %v556 = vlaneseq
        %v557 = vshrl.u32 %v556, 7
        %v558 = vsub.s32 0, %v557
        %v559 = vrot.slane %v554, %v558
        %v561 = vmul.f32 %v559, %v551
        %v562 = vmul.f32 %v559, %v552
        %v563 = vadd.f32 %v507, %v561
        %v564 = vadd.f32 %v508, %v562
        %v565 = vld [vmem:[#allocation2 + $0x2] sm:$0xff]
        %v566 = vld [vmem:[#allocation2 + $0xa] sm:$0xff]
        %s567 = scalar_lea.vmem %s0, 14
        %v568 = vld [vmem:[%s567] sm:$0x1]
        %v570 = vlaneseq
        %v571 = vshrl.u32 %v570, 7
        %v572 = vsub.s32 0, %v571
        %v573 = vrot.slane %v568, %v572
        %v575 = vmul.f32 %v573, %v565
        %v576 = vmul.f32 %v573, %v566
        %v577 = vadd.f32 %v521, %v575
        %v578 = vadd.f32 %v522, %v576
        %v579 = vld [vmem:[%s271 + $0x2] sm:$0xff]
        %v580 = vld [vmem:[%s271 + $0xa] sm:$0xff]
        %s581 = scalar_lea.vmem %s0, 15
        %v582 = vld [vmem:[%s581] sm:$0x1]
        %v584 = vlaneseq
        %v585 = vshrl.u32 %v584, 7
        %v586 = vsub.s32 0, %v585
        %v587 = vrot.slane %v582, %v586
        %v589 = vmul.f32 %v587, %v579
        %v590 = vmul.f32 %v587, %v580
        %v591 = vadd.f32 %v535, %v589
        %v592 = vadd.f32 %v536, %v590
        %v593 = vld [vmem:[%s290 + $0x2] sm:$0xff]
        %v594 = vld [vmem:[%s290 + $0xa] sm:$0xff]
        %s595 = scalar_lea.vmem %s0, 16
        %v596 = vld [vmem:[%s595] sm:$0x1]
        %v598 = vlaneseq
        %v599 = vshrl.u32 %v598, 7
        %v600 = vsub.s32 0, %v599
        %v601 = vrot.slane %v596, %v600
        %v603 = vmul.f32 %v601, %v593
        %v604 = vmul.f32 %v601, %v594
        %v605 = vadd.f32 %v549, %v603
        %v606 = vadd.f32 %v550, %v604
        %v607 = vld [vmem:[%s308 + $0x2] sm:$0xff]
        %v608 = vld [vmem:[%s308 + $0xa] sm:$0xff]
        %s609 = scalar_lea.vmem %s0, 17
        %v610 = vld [vmem:[%s609] sm:$0x1]
        %v612 = vlaneseq
        %v613 = vshrl.u32 %v612, 7
        %v614 = vsub.s32 0, %v613
        %v615 = vrot.slane %v610, %v614
        %v617 = vmul.f32 %v615, %v607
        %v618 = vmul.f32 %v615, %v608
        %v619 = vadd.f32 %v563, %v617
        %v620 = vadd.f32 %v564, %v618
        %v621 = vld [vmem:[%s327 + $0x2] sm:$0xff]
        %v622 = vld [vmem:[%s327 + $0xa] sm:$0xff]
        %s623 = scalar_lea.vmem %s0, 18
        %v624 = vld [vmem:[%s623] sm:$0x1]
        %v626 = vlaneseq
        %v627 = vshrl.u32 %v626, 7
        %v628 = vsub.s32 0, %v627
        %v629 = vrot.slane %v624, %v628
        %v631 = vmul.f32 %v629, %v621
        %v632 = vmul.f32 %v629, %v622
        %v633 = vadd.f32 %v577, %v631
        %v634 = vadd.f32 %v578, %v632
        %v635 = vld [vmem:[%s346 + $0x2] sm:$0xff]
        %v636 = vld [vmem:[%s346 + $0xa] sm:$0xff]
        %s637 = scalar_lea.vmem %s0, 19
        %v638 = vld [vmem:[%s637] sm:$0x1]
        %v640 = vlaneseq
        %v641 = vshrl.u32 %v640, 7
        %v642 = vsub.s32 0, %v641
        %v643 = vrot.slane %v638, %v642
        %v645 = vmul.f32 %v643, %v635
        %v646 = vmul.f32 %v643, %v636
        %v647 = vadd.f32 %v591, %v645
        %v648 = vadd.f32 %v592, %v646
        %v649 = vld [vmem:[%s365 + $0x2] sm:$0xff]
        %v650 = vld [vmem:[%s365 + $0xa] sm:$0xff]
        %s651 = scalar_lea.vmem %s0, 20
        %v652 = vld [vmem:[%s651] sm:$0x1]
        %v654 = vlaneseq
        %v655 = vshrl.u32 %v654, 7
        %v656 = vsub.s32 0, %v655
        %v657 = vrot.slane %v652, %v656
        %v659 = vmul.f32 %v657, %v649
        %v660 = vmul.f32 %v657, %v650
        %v661 = vadd.f32 %v605, %v659
        %v662 = vadd.f32 %v606, %v660
        %v663 = vld [vmem:[#allocation2 + $0x3] sm:$0xff]
        %v664 = vld [vmem:[#allocation2 + $0xb] sm:$0xff]
        %s665 = scalar_lea.vmem %s0, 21
        %v666 = vld [vmem:[%s665] sm:$0x1]
        %v668 = vlaneseq
        %v669 = vshrl.u32 %v668, 7
        %v670 = vsub.s32 0, %v669
        %v671 = vrot.slane %v666, %v670
        %v673 = vmul.f32 %v671, %v663
        %v674 = vmul.f32 %v671, %v664
        %v675 = vadd.f32 %v619, %v673
        %v676 = vadd.f32 %v620, %v674
        %v677 = vld [vmem:[%s271 + $0x3] sm:$0xff]
        %v678 = vld [vmem:[%s271 + $0xb] sm:$0xff]
        %s679 = scalar_lea.vmem %s0, 22
        %v680 = vld [vmem:[%s679] sm:$0x1]
        %v682 = vlaneseq
        %v683 = vshrl.u32 %v682, 7
        %v684 = vsub.s32 0, %v683
        %v685 = vrot.slane %v680, %v684
        %v687 = vmul.f32 %v685, %v677
        %v688 = vmul.f32 %v685, %v678
        %v689 = vadd.f32 %v633, %v687
        %v690 = vadd.f32 %v634, %v688
        %v691 = vld [vmem:[%s290 + $0x3] sm:$0xff]
        %v692 = vld [vmem:[%s290 + $0xb] sm:$0xff]
        %s693 = scalar_lea.vmem %s0, 23
        %v694 = vld [vmem:[%s693] sm:$0x1]
        %v696 = vlaneseq
        %v697 = vshrl.u32 %v696, 7
        %v698 = vsub.s32 0, %v697
        %v699 = vrot.slane %v694, %v698
        %v701 = vmul.f32 %v699, %v691
        %v702 = vmul.f32 %v699, %v692
        %v703 = vadd.f32 %v647, %v701
        %v704 = vadd.f32 %v648, %v702
        %v705 = vld [vmem:[%s308 + $0x3] sm:$0xff]
        %v706 = vld [vmem:[%s308 + $0xb] sm:$0xff]
        %s707 = scalar_lea.vmem %s0, 24
        %v708 = vld [vmem:[%s707] sm:$0x1]
        %v710 = vlaneseq
        %v711 = vshrl.u32 %v710, 7
        %v712 = vsub.s32 0, %v711
        %v713 = vrot.slane %v708, %v712
        %v715 = vmul.f32 %v713, %v705
        %v716 = vmul.f32 %v713, %v706
        %v717 = vadd.f32 %v661, %v715
        %v718 = vadd.f32 %v662, %v716
        %v719 = vld [vmem:[%s327 + $0x3] sm:$0xff]
        %v720 = vld [vmem:[%s327 + $0xb] sm:$0xff]
        %s721 = scalar_lea.vmem %s0, 25
        %v722 = vld [vmem:[%s721] sm:$0x1]
        %v724 = vlaneseq
        %v725 = vshrl.u32 %v724, 7
        %v726 = vsub.s32 0, %v725
        %v727 = vrot.slane %v722, %v726
        %v729 = vmul.f32 %v727, %v719
        %v730 = vmul.f32 %v727, %v720
        %v731 = vadd.f32 %v675, %v729
        %v732 = vadd.f32 %v676, %v730
        %v733 = vld [vmem:[%s346 + $0x3] sm:$0xff]
        %v734 = vld [vmem:[%s346 + $0xb] sm:$0xff]
        %s735 = scalar_lea.vmem %s0, 26
        %v736 = vld [vmem:[%s735] sm:$0x1]
        %v738 = vlaneseq
        %v739 = vshrl.u32 %v738, 7
        %v740 = vsub.s32 0, %v739
        %v741 = vrot.slane %v736, %v740
        %v743 = vmul.f32 %v741, %v733
        %v744 = vmul.f32 %v741, %v734
        %v745 = vadd.f32 %v689, %v743
        %v746 = vadd.f32 %v690, %v744
        %v747 = vld [vmem:[%s365 + $0x3] sm:$0xff]
        %v748 = vld [vmem:[%s365 + $0xb] sm:$0xff]
        %s749 = scalar_lea.vmem %s0, 27
        %v750 = vld [vmem:[%s749] sm:$0x1]
        %v752 = vlaneseq
        %v753 = vshrl.u32 %v752, 7
        %v754 = vsub.s32 0, %v753
        %v755 = vrot.slane %v750, %v754
        %v757 = vmul.f32 %v755, %v747
        %v758 = vmul.f32 %v755, %v748
        %v759 = vadd.f32 %v703, %v757
        %v760 = vadd.f32 %v704, %v758
        %v761 = vld [vmem:[#allocation2 + $0x4] sm:$0xff]
        %v762 = vld [vmem:[#allocation2 + $0xc] sm:$0xff]
        %s763 = scalar_lea.vmem %s0, 28
        %v764 = vld [vmem:[%s763] sm:$0x1]
        %v766 = vlaneseq
        %v767 = vshrl.u32 %v766, 7
        %v768 = vsub.s32 0, %v767
        %v769 = vrot.slane %v764, %v768
        %v771 = vmul.f32 %v769, %v761
        %v772 = vmul.f32 %v769, %v762
        %v773 = vadd.f32 %v717, %v771
        %v774 = vadd.f32 %v718, %v772
        %v775 = vld [vmem:[%s271 + $0x4] sm:$0xff]
        %v776 = vld [vmem:[%s271 + $0xc] sm:$0xff]
        %s777 = scalar_lea.vmem %s0, 29
        %v778 = vld [vmem:[%s777] sm:$0x1]
        %v780 = vlaneseq
        %v781 = vshrl.u32 %v780, 7
        %v782 = vsub.s32 0, %v781
        %v783 = vrot.slane %v778, %v782
        %v785 = vmul.f32 %v783, %v775
        %v786 = vmul.f32 %v783, %v776
        %v787 = vadd.f32 %v731, %v785
        %v788 = vadd.f32 %v732, %v786
        %v789 = vld [vmem:[%s290 + $0x4] sm:$0xff]
        %v790 = vld [vmem:[%s290 + $0xc] sm:$0xff]
        %s791 = scalar_lea.vmem %s0, 30
        %v792 = vld [vmem:[%s791] sm:$0x1]
        %v794 = vlaneseq
        %v795 = vshrl.u32 %v794, 7
        %v796 = vsub.s32 0, %v795
        %v797 = vrot.slane %v792, %v796
        %v799 = vmul.f32 %v797, %v789
        %v800 = vmul.f32 %v797, %v790
        %v801 = vadd.f32 %v745, %v799
        %v802 = vadd.f32 %v746, %v800
        %v803 = vld [vmem:[%s308 + $0x4] sm:$0xff]
        %v804 = vld [vmem:[%s308 + $0xc] sm:$0xff]
        %s805 = scalar_lea.vmem %s0, 31
        %v806 = vld [vmem:[%s805] sm:$0x1]
        %v808 = vlaneseq
        %v809 = vshrl.u32 %v808, 7
        %v810 = vsub.s32 0, %v809
        %v811 = vrot.slane %v806, %v810
        %v813 = vmul.f32 %v811, %v803
        %v814 = vmul.f32 %v811, %v804
        %v815 = vadd.f32 %v759, %v813
        %v816 = vadd.f32 %v760, %v814
        %v817 = vld [vmem:[%s327 + $0x4] sm:$0xff]
        %v818 = vld [vmem:[%s327 + $0xc] sm:$0xff]
        %s819 = scalar_lea.vmem %s0, 32
        %v820 = vld [vmem:[%s819] sm:$0x1]
        %v822 = vlaneseq
        %v823 = vshrl.u32 %v822, 7
        %v824 = vsub.s32 0, %v823
        %v825 = vrot.slane %v820, %v824
        %v827 = vmul.f32 %v825, %v817
        %v828 = vmul.f32 %v825, %v818
        %v829 = vadd.f32 %v773, %v827
        %v830 = vadd.f32 %v774, %v828
        %v831 = vld [vmem:[%s346 + $0x4] sm:$0xff]
        %v832 = vld [vmem:[%s346 + $0xc] sm:$0xff]
        %s833 = scalar_lea.vmem %s0, 33
        %v834 = vld [vmem:[%s833] sm:$0x1]
        %v836 = vlaneseq
        %v837 = vshrl.u32 %v836, 7
        %v838 = vsub.s32 0, %v837
        %v839 = vrot.slane %v834, %v838
        %v841 = vmul.f32 %v839, %v831
        %v842 = vmul.f32 %v839, %v832
        %v843 = vadd.f32 %v787, %v841
        %v844 = vadd.f32 %v788, %v842
        %v845 = vld [vmem:[%s365 + $0x4] sm:$0xff]
        %v846 = vld [vmem:[%s365 + $0xc] sm:$0xff]
        %s847 = scalar_lea.vmem %s0, 34
        %v848 = vld [vmem:[%s847] sm:$0x1]
        %v850 = vlaneseq
        %v851 = vshrl.u32 %v850, 7
        %v852 = vsub.s32 0, %v851
        %v853 = vrot.slane %v848, %v852
        %v855 = vmul.f32 %v853, %v845
        %v856 = vmul.f32 %v853, %v846
        %v857 = vadd.f32 %v801, %v855
        %v858 = vadd.f32 %v802, %v856
        %v859 = vld [vmem:[#allocation2 + $0x5] sm:$0xff]
        %v860 = vld [vmem:[#allocation2 + $0xd] sm:$0xff]
        %s861 = scalar_lea.vmem %s0, 35
        %v862 = vld [vmem:[%s861] sm:$0x1]
        %v864 = vlaneseq
        %v865 = vshrl.u32 %v864, 7
        %v866 = vsub.s32 0, %v865
        %v867 = vrot.slane %v862, %v866
        %v869 = vmul.f32 %v867, %v859
        %v870 = vmul.f32 %v867, %v860
        %v871 = vadd.f32 %v815, %v869
        %v872 = vadd.f32 %v816, %v870
        %v873 = vld [vmem:[%s271 + $0x5] sm:$0xff]
        %v874 = vld [vmem:[%s271 + $0xd] sm:$0xff]
        %s875 = scalar_lea.vmem %s0, 36
        %v876 = vld [vmem:[%s875] sm:$0x1]
        %v878 = vlaneseq
        %v879 = vshrl.u32 %v878, 7
        %v880 = vsub.s32 0, %v879
        %v881 = vrot.slane %v876, %v880
        %v883 = vmul.f32 %v881, %v873
        %v884 = vmul.f32 %v881, %v874
        %v885 = vadd.f32 %v829, %v883
        %v886 = vadd.f32 %v830, %v884
        %v887 = vld [vmem:[%s290 + $0x5] sm:$0xff]
        %v888 = vld [vmem:[%s290 + $0xd] sm:$0xff]
        %s889 = scalar_lea.vmem %s0, 37
        %v890 = vld [vmem:[%s889] sm:$0x1]
        %v892 = vlaneseq
        %v893 = vshrl.u32 %v892, 7
        %v894 = vsub.s32 0, %v893
        %v895 = vrot.slane %v890, %v894
        %v897 = vmul.f32 %v895, %v887
        %v898 = vmul.f32 %v895, %v888
        %v899 = vadd.f32 %v843, %v897
        %v900 = vadd.f32 %v844, %v898
        %v901 = vld [vmem:[%s308 + $0x5] sm:$0xff]
        %v902 = vld [vmem:[%s308 + $0xd] sm:$0xff]
        %s903 = scalar_lea.vmem %s0, 38
        %v904 = vld [vmem:[%s903] sm:$0x1]
        %v906 = vlaneseq
        %v907 = vshrl.u32 %v906, 7
        %v908 = vsub.s32 0, %v907
        %v909 = vrot.slane %v904, %v908
        %v911 = vmul.f32 %v909, %v901
        %v912 = vmul.f32 %v909, %v902
        %v913 = vadd.f32 %v857, %v911
        %v914 = vadd.f32 %v858, %v912
        %v915 = vld [vmem:[%s327 + $0x5] sm:$0xff]
        %v916 = vld [vmem:[%s327 + $0xd] sm:$0xff]
        %s917 = scalar_lea.vmem %s0, 39
        %v918 = vld [vmem:[%s917] sm:$0x1]
        %v920 = vlaneseq
        %v921 = vshrl.u32 %v920, 7
        %v922 = vsub.s32 0, %v921
        %v923 = vrot.slane %v918, %v922
        %v925 = vmul.f32 %v923, %v915
        %v926 = vmul.f32 %v923, %v916
        %v927 = vadd.f32 %v871, %v925
        %v928 = vadd.f32 %v872, %v926
        %v929 = vld [vmem:[%s346 + $0x5] sm:$0xff]
        %v930 = vld [vmem:[%s346 + $0xd] sm:$0xff]
        %s931 = scalar_lea.vmem %s0, 40
        %v932 = vld [vmem:[%s931] sm:$0x1]
        %v934 = vlaneseq
        %v935 = vshrl.u32 %v934, 7
        %v936 = vsub.s32 0, %v935
        %v937 = vrot.slane %v932, %v936
        %v939 = vmul.f32 %v937, %v929
        %v940 = vmul.f32 %v937, %v930
        %v941 = vadd.f32 %v885, %v939
        %v942 = vadd.f32 %v886, %v940
        %v943 = vld [vmem:[%s365 + $0x5] sm:$0xff]
        %v944 = vld [vmem:[%s365 + $0xd] sm:$0xff]
        %s945 = scalar_lea.vmem %s0, 41
        %v946 = vld [vmem:[%s945] sm:$0x1]
        %v948 = vlaneseq
        %v949 = vshrl.u32 %v948, 7
        %v950 = vsub.s32 0, %v949
        %v951 = vrot.slane %v946, %v950
        %v953 = vmul.f32 %v951, %v943
        %v954 = vmul.f32 %v951, %v944
        %v955 = vadd.f32 %v899, %v953
        %v956 = vadd.f32 %v900, %v954
        %v957 = vld [vmem:[#allocation2 + $0x6] sm:$0xff]
        %v958 = vld [vmem:[#allocation2 + $0xe] sm:$0xff]
        %s959 = scalar_lea.vmem %s0, 42
        %v960 = vld [vmem:[%s959] sm:$0x1]
        %v962 = vlaneseq
        %v963 = vshrl.u32 %v962, 7
        %v964 = vsub.s32 0, %v963
        %v965 = vrot.slane %v960, %v964
        %v967 = vmul.f32 %v965, %v957
        %v968 = vmul.f32 %v965, %v958
        %v969 = vadd.f32 %v913, %v967
        %v970 = vadd.f32 %v914, %v968
        %v971 = vld [vmem:[%s271 + $0x6] sm:$0xff]
        %v972 = vld [vmem:[%s271 + $0xe] sm:$0xff]
        %s973 = scalar_lea.vmem %s0, 43
        %v974 = vld [vmem:[%s973] sm:$0x1]
        %v976 = vlaneseq
        %v977 = vshrl.u32 %v976, 7
        %v978 = vsub.s32 0, %v977
        %v979 = vrot.slane %v974, %v978
        %v981 = vmul.f32 %v979, %v971
        %v982 = vmul.f32 %v979, %v972
        %v983 = vadd.f32 %v927, %v981
        %v984 = vadd.f32 %v928, %v982
        %v985 = vld [vmem:[%s290 + $0x6] sm:$0xff]
        %v986 = vld [vmem:[%s290 + $0xe] sm:$0xff]
        %s987 = scalar_lea.vmem %s0, 44
        %v988 = vld [vmem:[%s987] sm:$0x1]
        %v990 = vlaneseq
        %v991 = vshrl.u32 %v990, 7
        %v992 = vsub.s32 0, %v991
        %v993 = vrot.slane %v988, %v992
        %v995 = vmul.f32 %v993, %v985
        %v996 = vmul.f32 %v993, %v986
        %v997 = vadd.f32 %v941, %v995
        %v998 = vadd.f32 %v942, %v996
        %v999 = vld [vmem:[%s308 + $0x6] sm:$0xff]
        %v1000 = vld [vmem:[%s308 + $0xe] sm:$0xff]
        %s1001 = scalar_lea.vmem %s0, 45
        %v1002 = vld [vmem:[%s1001] sm:$0x1]
        %v1004 = vlaneseq
        %v1005 = vshrl.u32 %v1004, 7
        %v1006 = vsub.s32 0, %v1005
        %v1007 = vrot.slane %v1002, %v1006
        %v1009 = vmul.f32 %v1007, %v999
        %v1010 = vmul.f32 %v1007, %v1000
        %v1011 = vadd.f32 %v955, %v1009
        %v1012 = vadd.f32 %v956, %v1010
        %v1013 = vld [vmem:[%s327 + $0x6] sm:$0xff]
        %v1014 = vld [vmem:[%s327 + $0xe] sm:$0xff]
        %s1015 = scalar_lea.vmem %s0, 46
        %v1016 = vld [vmem:[%s1015] sm:$0x1]
        %v1018 = vlaneseq
        %v1019 = vshrl.u32 %v1018, 7
        %v1020 = vsub.s32 0, %v1019
        %v1021 = vrot.slane %v1016, %v1020
        %v1023 = vmul.f32 %v1021, %v1013
        %v1024 = vmul.f32 %v1021, %v1014
        %v1025 = vadd.f32 %v969, %v1023
        %v1026 = vadd.f32 %v970, %v1024
        %v1027 = vld [vmem:[%s346 + $0x6] sm:$0xff]
        %v1028 = vld [vmem:[%s346 + $0xe] sm:$0xff]
        %s1029 = scalar_lea.vmem %s0, 47
        %v1030 = vld [vmem:[%s1029] sm:$0x1]
        %v1032 = vlaneseq
        %v1033 = vshrl.u32 %v1032, 7
        %v1034 = vsub.s32 0, %v1033
        %v1035 = vrot.slane %v1030, %v1034
        %v1037 = vmul.f32 %v1035, %v1027
        %v1038 = vmul.f32 %v1035, %v1028
        %v1039 = vadd.f32 %v983, %v1037
        %v1040 = vadd.f32 %v984, %v1038
        %v1041 = vld [vmem:[%s365 + $0x6] sm:$0xff]
        %v1042 = vld [vmem:[%s365 + $0xe] sm:$0xff]
        %s1043 = scalar_lea.vmem %s0, 48
        %v1044 = vld [vmem:[%s1043] sm:$0x1]
        %v1046 = vlaneseq
        %v1047 = vshrl.u32 %v1046, 7
        %v1048 = vsub.s32 0, %v1047
        %v1049 = vrot.slane %v1044, %v1048
        %v1051 = vmul.f32 %v1049, %v1041
        %v1052 = vmul.f32 %v1049, %v1042
        %v1053 = vadd.f32 %v997, %v1051
        %v1054 = vadd.f32 %v998, %v1052
        %v1055 = vadd.f32 %v1053, %v1011
        %v1056 = vadd.f32 %v1054, %v1012
        %v1057 = vadd.f32 %v1025, %v1039
        %v1058 = vadd.f32 %v1026, %v1040
        %v1059 = vadd.f32 %v1055, %v1057
        %v1060 = vadd.f32 %v1056, %v1058
        %1063 = vrot.lane.b32.xlu0 %v1059, 112
        %v1064 = vpop.permute.xlu0 %1063
        %1065 = vrot.lane.b32.xlu0 %v1060, 112
        %v1066 = vpop.permute.xlu0 %1065
        %v1069 = vadd.f32 %v1059, %v1064
        %v1070 = vadd.f32 %v1060, %v1066
        %v1071 = vxor.u32 %v1069, 2147483648
        %v1072 = vxor.u32 %v1070, 2147483648
        %v1073 = vmul.f32 %v1071, 1.442695
        %v1074 = vpow.pop %v1073
        %v1075 = vmul.f32 %v1072, 1.442695
        %v1076 = vpow.pop %v1075
        %v1077 = vadd.f32 %v1074, 1.0
        %v1078 = vadd.f32 %v1076, 1.0
        %v1079 = vrcp.pop %v1077
        %v1080 = vmul.f32 1.0, %v1079
        %v1081 = vrcp.pop %v1078
        %v1082 = vmul.f32 1.0, %v1081
        %1083 = vst.msk [vmem:[%s161] sm:$0xff] %vm170, %v1080
        %1084 = vst.msk [vmem:[%s161 + $0x8] sm:$0xff] %vm170, %v1082
        %s1085 = sand.u32 %s74, 1
        %s1086 = scalar_lea.sflag [#allocation5], %s1085
        %s1087 = sand.u32 %s74, 1
        %s1088 = smul.addr %s1087, 16
        %s1089 = scalar_lea.vmem [#allocation6], %s1088
        // Predicated region
        $region33: #{tpu_custom_call.1} parent=27 // pred_check
          %p1090 = pneg %p84
        $region34: #{tpu_custom_call.1} parent=27 // pred_check_branch
          %1092 = sbr.rel (%p1090) target = $region36
        $region35: #{tpu_custom_call.1} parent=27 // pred_region
          %s1094 = ssub.s32 256, 256
          %1095 = vsyncadd %s1086, %s1094
          %s1096 = smul.addr %s19, 2
          %s1097 = smul.addr %s1096, 128
          %s1098 = scalar_lea.hbm %s2, %s1097
          %s1099 = sshll.u32 %s1089, 4
          %s1100 = int_to_ptr.vmem [resolvable:$true] %s1099
          %1105 = dma.vmem_to_hbm [thread:$0]  %s1100, 256, %s1098, %s1086, 128, 128, 8
        $region36: #{tpu_custom_call.1} parent=27 // pred_fallthru
          _
      $region28: #{tpu_custom_call.1} parent=5 // pred_fallthru
        _
      %p1106 = scmp.le.s32.totalorder 2, %s14
      // Predicated region
      $region37: #{tpu_custom_call.1} parent=5 // pred_check
        %p1107 = pneg %p1106
      $region38: #{tpu_custom_call.1} parent=5 // pred_check_branch
        %1109 = sbr.rel (%p1107) target = $region40
      $region39: #{tpu_custom_call.1} parent=5 // pred_region
        %s1110 = ssub.s32 %s14, 2
        // Predicated region
        $region41: #{tpu_custom_call.1} parent=39 // pred_check
          %p1111 = pneg %p90
        $region42: #{tpu_custom_call.1} parent=39 // pred_check_branch
          %1113 = sbr.rel (%p1111) target = $region44
        $region43: #{tpu_custom_call.1} parent=39 // pred_region
          %s1114 = sand.u32 %s75, 1
          %s1115 = scalar_lea.sflag [#allocation5], %s1114
          %s1116 = sand.u32 %s75, 1
          %s1117 = smul.addr %s1116, 16
          %s1118 = scalar_lea.vmem [#allocation6], %s1117
          %1119 = dma.done %s1115, 256
        $region44: #{tpu_custom_call.1} parent=39 // pred_fallthru
          _
      $region40: #{tpu_custom_call.1} parent=5 // pred_fallthru
        _
    $region6: #{tpu_custom_call.1} parent=1 // loop_footer
      %s18 = sadd.s32 1, %s14
    $region7: #{tpu_custom_call.1} parent=1 // loop_footer_branch
      %13 = sbr.rel target = $region3
    $region8: #{tpu_custom_call.1} parent=1 // loop_exit
      _
    %1120 = vsyncpa [#allocation4], 1
    %s1121 = scalar_lea.sflag [#allocation4], 1
    %1122 = vsyncpa %s1121, 1
    %1123 = vsyncpa [#allocation5], 1
    %s1124 = scalar_lea.sflag [#allocation5], 1
    %1125 = vsyncpa %s1124, 1

</llo_original>
